<compile_context>
chip_gen: v6e
topology: v6e:2x2x1
jax: 0.10.0
libtpu: 0.0.40
codegen_flags: <defaults>
</compile_context>

<pallas_src>
import functools
import math

import jax
import jax.numpy as jnp
from jax.experimental import pallas as pl
from jax.experimental.pallas import tpu as pltpu


def _round_up(n, m):
    return ((n + m - 1) // m) * m


# -------------------------------- kernel -----------------------------------

def usad_kernel(x_ref,
                we0_ref, be0_ref, we1_ref, be1_ref,        # encoder
                wda_ref, bda_ref,                          # fused dec1|dec2 first layers
                wdb_ref, bdb_ref,                          # block-diag fused output layers
                wd2b_ref, bd2b_ref,                        # decoder2 output layer (for w3)
                o1_ref, o2_ref, o3_ref,
                *, hd_pad, input_size):
    relu = lambda t: jnp.maximum(t, 0.0)

    def sigmoid(t):
        # Single-EUP-op sigmoid (cheaper than exp + reciprocal).
        return 0.5 * jnp.tanh(0.5 * t) + 0.5

    def lin(w, b, t):
        # (out, in) @ (in, TB) + (out, 1) -> (out, TB); f32 MXU accumulation.
        return jnp.dot(w, t, preferred_element_type=jnp.float32) + b

    def encoder(t):
        h = relu(lin(we0_ref[...], be0_ref[...], t))      # (16, TB) -> (12, TB)
        return relu(lin(we1_ref[...], be1_ref[...], h))   # (12, TB) -> (8,  TB)

    # Batch-major HBM tile -> lane-dense feature-major compute layout.
    # In-kernel transpose uses the otherwise-idle XLU (replaces the old
    # wrapper-side XLA pad+transpose, which doubled HBM traffic).
    x = x_ref[...].astype(jnp.float32).T                  # (input_size, TB)

    z = encoder(x)                                        # (8, TB)

    # Fused decoder1|decoder2 first layers: (32, 8) @ (8, TB) -> (32, TB).
    # Rows [0:hd_pad) -> decoder1 hidden (zero-padded 12->16), [hd_pad:2*hd_pad) -> decoder2.
    hd = relu(lin(wda_ref[...], bda_ref[...], z))

    # Block-diagonal fused output layers: [w1; w2] = sigmoid(blockdiag(wd1b, wd2b) @ hd + b).
    w12 = sigmoid(lin(wdb_ref[...], bdb_ref[...], hd))    # (2*input_size, TB)
    w1 = w12[0:input_size, :]
    w2 = w12[input_size:2 * input_size, :]

    # w3 = decoder2(encoder(w1)) -- only decoder2's half of the fused first layer.
    z3 = encoder(w1)
    hd3 = relu(lin(wda_ref[hd_pad:2 * hd_pad, :], bda_ref[hd_pad:2 * hd_pad, :], z3))
    w3 = sigmoid(lin(wd2b_ref[...], bd2b_ref[...], hd3))  # (input_size, TB)

    # Transpose back to batch-major and cast to the bf16 boundary dtype at the store.
    o1_ref[...] = w1.T.astype(o1_ref.dtype)               # (TB, input_size)
    o2_ref[...] = w2.T.astype(o2_ref.dtype)
    o3_ref[...] = w3.T.astype(o3_ref.dtype)


# ------------------------------- wrapper ------------------------------------

def _prepare_kernel_params(p, hd_pad, input_size):
    """Fuse/pad decoder weights so in-kernel slices stay sublane-aligned."""
    f32 = jnp.float32

    def pad_rows(wk, bk):
        o, i = p[wk].shape
        wpad = jnp.zeros((hd_pad, i), f32).at[:o, :].set(p[wk].astype(f32))
        bpad = jnp.zeros((hd_pad, 1), f32).at[:o, :].set(p[bk].astype(f32))
        return wpad, bpad

    def pad_cols(wk):
        o, i = p[wk].shape
        return jnp.zeros((o, hd_pad), f32).at[:, :i].set(p[wk].astype(f32))

    w1a, b1a = pad_rows("wd1a", "bd1a")
    w2a, b2a = pad_rows("wd2a", "bd2a")
    wd1b_p = pad_cols("wd1b")                       # (input_size, hd_pad)
    wd2b_p = pad_cols("wd2b")                       # (input_size, hd_pad)

    # Block-diagonal fused decoder output weight: (2*input_size, 2*hd_pad).
    wdb = jnp.zeros((2 * input_size, 2 * hd_pad), f32)
    wdb = wdb.at[:input_size, :hd_pad].set(wd1b_p)
    wdb = wdb.at[input_size:, hd_pad:].set(wd2b_p)
    bdb = jnp.concatenate([p["bd1b"].astype(f32), p["bd2b"].astype(f32)], axis=0)

    return {
        "we0": p["we0"].astype(f32), "be0": p["be0"].astype(f32),
        "we1": p["we1"].astype(f32), "be1": p["be1"].astype(f32),
        "wda": jnp.concatenate([w1a, w2a], axis=0),   # (2*hd_pad, latent)
        "bda": jnp.concatenate([b1a, b2a], axis=0),   # (2*hd_pad, 1)
        "wdb": wdb, "bdb": bdb,
        "wd2b": wd2b_p, "bd2b": p["bd2b"].astype(f32),
    }


def usad_forward(w, params, *, tb=4096, out_dtype=jnp.bfloat16):
    """w: (B, input_size). params: PyTorch-layout (out, in) weights, (out, 1) biases.

    Returns (w1, w2, w3), each (B, input_size) in `out_dtype` (bf16 by default to
    halve output HBM traffic; compute stays f32).
    """
    B, input_size = w.shape
    hd = params["wd1a"].shape[0]          # decoder hidden width (12)
    hd_pad = _round_up(hd, 8)             # padded to 16 for aligned slicing

    kp = _prepare_kernel_params(params, hd_pad, input_size)

    # Batch tile: multiple of 128, capped so double-buffered (lane-padded) blocks
    # stay well inside the scoped-VMEM budget on every generation.
    TB = max(128, min(_round_up(tb, 128), _round_up(B, 128)))
    Bp = _round_up(B, TB)
    grid = (Bp // TB,)

    # Only pad / slice when the batch is ragged; TB-divisible batches take the
    # zero-wrapper-copy path.
    if Bp != B:
        x = jnp.zeros((Bp, input_size), w.dtype).at[:B, :].set(w)
    else:
        x = w

    weight_args = (kp["we0"], kp["be0"], kp["we1"], kp["be1"],
                   kp["wda"], kp["bda"],
                   kp["wdb"], kp["bdb"],
                   kp["wd2b"], kp["bd2b"])

    def full_spec(arr):
        # Whole-array block, constant index map -> stays VMEM-resident across steps.
        return pl.BlockSpec(arr.shape, lambda i: (0, 0))

    in_specs = [pl.BlockSpec((TB, input_size), lambda i: (i, 0))]
    in_specs += [full_spec(a) for a in weight_args]
    out_specs = tuple(pl.BlockSpec((TB, input_size), lambda i: (i, 0)) for _ in range(3))
    out_shapes = tuple(jax.ShapeDtypeStruct((Bp, input_size), out_dtype) for _ in range(3))

    kernel = functools.partial(usad_kernel, hd_pad=hd_pad, input_size=input_size)

    w1, w2, w3 = pl.pallas_call(
        kernel,
        out_shape=out_shapes,
        grid=grid,
        in_specs=in_specs,
        out_specs=out_specs,
        compiler_params=pltpu.CompilerParams(
            # "parallel" -> batch axis can be sharded across TensorCores on
            # multi-core parts; raise scoped VMEM (v5e default is only 16 MiB).
            dimension_semantics=("parallel",),
            vmem_limit_bytes=32 * 1024 * 1024),
    )(x, *weight_args)

    if Bp != B:
        w1, w2, w3 = w1[:B], w2[:B], w3[:B]
    return w1, w2, w3


# ------------------------- parameter construction --------------------------

def _init_linear(key, fan_in, fan_out):
    """PyTorch-style uniform init; native nn.Linear layout: W (out, in), b (out, 1)."""
    kw, kb = jax.random.split(key)
    bound = 1.0 / math.sqrt(fan_in)
    w_mat = jax.random.uniform(kw, (fan_out, fan_in), jnp.float32, -bound, bound)
    b = jax.random.uniform(kb, (fan_out, 1), jnp.float32, -bound, bound)
    return w_mat, b


def make_params(key, input_size, hidden_neurons):
    h = hidden_neurons
    keys = jax.random.split(key, 6)
    p = {}
    # Encoder: input_size -> h[0] -> h[1]   (len(h)=3 => (len+1)//2 = 2 layers)
    p["we0"], p["be0"] = _init_linear(keys[0], input_size, h[0])
    p["we1"], p["be1"] = _init_linear(keys[1], h[0], h[1])
    # Decoder1: h[1] -> h[2], then h[-1] -> input_size
    p["wd1a"], p["bd1a"] = _init_linear(keys[2], h[1], h[2])
    p["wd1b"], p["bd1b"] = _init_linear(keys[3], h[-1], input_size)
    # Decoder2: same architecture, different weights
    p["wd2a"], p["bd2a"] = _init_linear(keys[4], h[1], h[2])
    p["wd2b"], p["bd2b"] = _init_linear(keys[5], h[-1], input_size)
    return p


# --------------------------- pure-JAX reference -----------------------------

def usad_reference(w, p):
    relu = lambda x: jnp.maximum(x, 0.0)
    sig = jax.nn.sigmoid
    lin = lambda x, wm, b: x @ wm.T + b.T

    def enc(x):
        x = relu(lin(x, p["we0"], p["be0"]))
        return relu(lin(x, p["we1"], p["be1"]))

    def dec(z, a, ba, b, bb):
        h = relu(lin(z, p[a], p[ba]))
        return sig(lin(h, p[b], p[bb]))

    z = enc(w)
    w1 = dec(z, "wd1a", "bd1a", "wd1b", "bd1b")
    w2 = dec(z, "wd2a", "bd2a", "wd2b", "bd2b")
    w3 = dec(enc(w1), "wd2a", "bd2a", "wd2b", "bd2b")
    return w1, w2, w3


if __name__ == "__main__":
    key = jax.random.PRNGKey(0)
    k_in, k_par = jax.random.split(key)

    batch = 300            # not a multiple of the tile -> exercises grid + ragged pad
    input_size = 16
    hidden_neurons = [12, 8, 12]

    w = jax.random.normal(k_in, (batch, input_size), jnp.float32)
    params = make_params(k_par, input_size, hidden_neurons)

    # tb=128 so the small demo has a multi-step grid; default 4096 for real batches.
    w1, w2, w3 = usad_forward(w, params, tb=128)
    jax.block_until_ready((w1, w2, w3))

    r1, r2, r3 = usad_reference(w, params)
    f32 = jnp.float32
    assert w1.shape == (batch, input_size) and w1.dtype == jnp.bfloat16
    assert jnp.allclose(w1.astype(f32), r1, atol=1e-2), "w1 mismatch"
    assert jnp.allclose(w2.astype(f32), r2, atol=1e-2), "w2 mismatch"
    assert jnp.allclose(w3.astype(f32), r3, atol=1e-2), "w3 mismatch"

    print("KERNEL_OK")
</pallas_src>

<mosaic_0001>
module attributes {stable_mosaic.version = 11 : i64} {
  func.func @usad_kernel(%arg0: i32, %arg1: memref<128x16xf32, #tpu.memory_space<vmem>>, %arg2: memref<12x16xf32, #tpu.memory_space<vmem>>, %arg3: memref<12x1xf32, #tpu.memory_space<vmem>>, %arg4: memref<8x12xf32, #tpu.memory_space<vmem>>, %arg5: memref<8x1xf32, #tpu.memory_space<vmem>>, %arg6: memref<32x8xf32, #tpu.memory_space<vmem>>, %arg7: memref<32x1xf32, #tpu.memory_space<vmem>>, %arg8: memref<32x32xf32, #tpu.memory_space<vmem>>, %arg9: memref<32x1xf32, #tpu.memory_space<vmem>>, %arg10: memref<16x16xf32, #tpu.memory_space<vmem>>, %arg11: memref<16x1xf32, #tpu.memory_space<vmem>>, %arg12: memref<128x16xbf16, #tpu.memory_space<vmem>>, %arg13: memref<128x16xbf16, #tpu.memory_space<vmem>>, %arg14: memref<128x16xbf16, #tpu.memory_space<vmem>>) attributes {dimension_semantics = [#tpu.dimension_semantics<parallel>], iteration_bounds = array<i64: 3>, scalar_prefetch = 0 : i64, scratch_operands = 0 : i64, tpu.core_type = #tpu.core_type<tc>, window_params = [{transform_indices = @transform_0, window_bounds = array<i64: 128, 16>}, {pipeline_mode = #tpu.pipeline_mode<synchronous>, transform_indices = @transform_1, window_bounds = array<i64: 12, 16>}, {pipeline_mode = #tpu.pipeline_mode<synchronous>, transform_indices = @transform_2, window_bounds = array<i64: 12, 1>}, {pipeline_mode = #tpu.pipeline_mode<synchronous>, transform_indices = @transform_3, window_bounds = array<i64: 8, 12>}, {pipeline_mode = #tpu.pipeline_mode<synchronous>, transform_indices = @transform_4, window_bounds = array<i64: 8, 1>}, {pipeline_mode = #tpu.pipeline_mode<synchronous>, transform_indices = @transform_5, window_bounds = array<i64: 32, 8>}, {pipeline_mode = #tpu.pipeline_mode<synchronous>, transform_indices = @transform_6, window_bounds = array<i64: 32, 1>}, {pipeline_mode = #tpu.pipeline_mode<synchronous>, transform_indices = @transform_7, window_bounds = array<i64: 32, 32>}, {pipeline_mode = #tpu.pipeline_mode<synchronous>, transform_indices = @transform_8, window_bounds = array<i64: 32, 1>}, {pipeline_mode = #tpu.pipeline_mode<synchronous>, transform_indices = @transform_9, window_bounds = array<i64: 16, 16>}, {pipeline_mode = #tpu.pipeline_mode<synchronous>, transform_indices = @transform_10, window_bounds = array<i64: 16, 1>}, {transform_indices = @transform_11, window_bounds = array<i64: 128, 16>}, {transform_indices = @transform_12, window_bounds = array<i64: 128, 16>}, {transform_indices = @transform_13, window_bounds = array<i64: 128, 16>}]} {
    %c0 = arith.constant 0 : index
    %c0_0 = arith.constant 0 : index
    %0 = vector.load %arg1[%c0, %c0_0] : memref<128x16xf32, #tpu.memory_space<vmem>>, vector<128x16xf32>
    %1 = tpu.transpose %0, [1, 0] : vector<128x16xf32> -> vector<16x128xf32>
    %c0_1 = arith.constant 0 : index
    %c0_2 = arith.constant 0 : index
    %2 = vector.load %arg2[%c0_1, %c0_2] : memref<12x16xf32, #tpu.memory_space<vmem>>, vector<12x16xf32>
    %c0_3 = arith.constant 0 : index
    %c0_4 = arith.constant 0 : index
    %3 = vector.load %arg3[%c0_3, %c0_4] : memref<12x1xf32, #tpu.memory_space<vmem>>, vector<12x1xf32>
    %cst = arith.constant dense<0.000000e+00> : vector<12x128xf32>
    %4 = tpu.matmul %2, %1, %cst {dimension_numbers = #tpu.dot_dimension_numbers<[1], [0], [0], [1], [0, 0, 1, 1], [], []>} : vector<12x16xf32>, vector<16x128xf32>, vector<12x128xf32> -> vector<12x128xf32>
    %5 = vector.broadcast %3 : vector<12x1xf32> to vector<12x128xf32>
    %6 = arith.addf %4, %5 : vector<12x128xf32>
    %cst_5 = arith.constant 0.000000e+00 : f32
    %7 = vector.broadcast %cst_5 : f32 to vector<12x128xf32>
    %8 = arith.maximumf %6, %7 : vector<12x128xf32>
    %c0_6 = arith.constant 0 : index
    %c0_7 = arith.constant 0 : index
    %9 = vector.load %arg4[%c0_6, %c0_7] : memref<8x12xf32, #tpu.memory_space<vmem>>, vector<8x12xf32>
    %c0_8 = arith.constant 0 : index
    %c0_9 = arith.constant 0 : index
    %10 = vector.load %arg5[%c0_8, %c0_9] : memref<8x1xf32, #tpu.memory_space<vmem>>, vector<8x1xf32>
    %cst_10 = arith.constant dense<0.000000e+00> : vector<8x128xf32>
    %11 = tpu.matmul %9, %8, %cst_10 {dimension_numbers = #tpu.dot_dimension_numbers<[1], [0], [0], [1], [0, 0, 1, 1], [], []>} : vector<8x12xf32>, vector<12x128xf32>, vector<8x128xf32> -> vector<8x128xf32>
    %12 = vector.broadcast %10 : vector<8x1xf32> to vector<8x128xf32>
    %13 = arith.addf %11, %12 : vector<8x128xf32>
    %cst_11 = arith.constant 0.000000e+00 : f32
    %14 = vector.broadcast %cst_11 : f32 to vector<8x128xf32>
    %15 = arith.maximumf %13, %14 : vector<8x128xf32>
    %c0_12 = arith.constant 0 : index
    %c0_13 = arith.constant 0 : index
    %16 = vector.load %arg6[%c0_12, %c0_13] : memref<32x8xf32, #tpu.memory_space<vmem>>, vector<32x8xf32>
    %c0_14 = arith.constant 0 : index
    %c0_15 = arith.constant 0 : index
    %17 = vector.load %arg7[%c0_14, %c0_15] : memref<32x1xf32, #tpu.memory_space<vmem>>, vector<32x1xf32>
    %cst_16 = arith.constant dense<0.000000e+00> : vector<32x128xf32>
    %18 = tpu.matmul %16, %15, %cst_16 {dimension_numbers = #tpu.dot_dimension_numbers<[1], [0], [0], [1], [0, 0, 1, 1], [], []>} : vector<32x8xf32>, vector<8x128xf32>, vector<32x128xf32> -> vector<32x128xf32>
    %19 = vector.broadcast %17 : vector<32x1xf32> to vector<32x128xf32>
    %20 = arith.addf %18, %19 : vector<32x128xf32>
    %cst_17 = arith.constant 0.000000e+00 : f32
    %21 = vector.broadcast %cst_17 : f32 to vector<32x128xf32>
    %22 = arith.maximumf %20, %21 : vector<32x128xf32>
    %c0_18 = arith.constant 0 : index
    %c0_19 = arith.constant 0 : index
    %23 = vector.load %arg8[%c0_18, %c0_19] : memref<32x32xf32, #tpu.memory_space<vmem>>, vector<32x32xf32>
    %c0_20 = arith.constant 0 : index
    %c0_21 = arith.constant 0 : index
    %24 = vector.load %arg9[%c0_20, %c0_21] : memref<32x1xf32, #tpu.memory_space<vmem>>, vector<32x1xf32>
    %cst_22 = arith.constant dense<0.000000e+00> : vector<32x128xf32>
    %25 = tpu.matmul %23, %22, %cst_22 {dimension_numbers = #tpu.dot_dimension_numbers<[1], [0], [0], [1], [0, 0, 1, 1], [], []>} : vector<32x32xf32>, vector<32x128xf32>, vector<32x128xf32> -> vector<32x128xf32>
    %26 = vector.broadcast %24 : vector<32x1xf32> to vector<32x128xf32>
    %27 = arith.addf %25, %26 : vector<32x128xf32>
    %cst_23 = arith.constant 5.000000e-01 : f32
    %28 = vector.broadcast %cst_23 : f32 to vector<32x128xf32>
    %29 = arith.mulf %28, %27 : vector<32x128xf32>
    %30 = math.tanh %29 : vector<32x128xf32>
    %cst_24 = arith.constant 5.000000e-01 : f32
    %31 = vector.broadcast %cst_24 : f32 to vector<32x128xf32>
    %32 = arith.mulf %31, %30 : vector<32x128xf32>
    %cst_25 = arith.constant 5.000000e-01 : f32
    %33 = vector.broadcast %cst_25 : f32 to vector<32x128xf32>
    %34 = arith.addf %32, %33 : vector<32x128xf32>
    %35 = vector.extract_strided_slice %34 {offsets = [0, 0], sizes = [16, 128], strides = [1, 1]} : vector<32x128xf32> to vector<16x128xf32>
    %36 = vector.extract_strided_slice %34 {offsets = [16, 0], sizes = [16, 128], strides = [1, 1]} : vector<32x128xf32> to vector<16x128xf32>
    %c0_26 = arith.constant 0 : index
    %c0_27 = arith.constant 0 : index
    %37 = vector.load %arg2[%c0_26, %c0_27] : memref<12x16xf32, #tpu.memory_space<vmem>>, vector<12x16xf32>
    %c0_28 = arith.constant 0 : index
    %c0_29 = arith.constant 0 : index
    %38 = vector.load %arg3[%c0_28, %c0_29] : memref<12x1xf32, #tpu.memory_space<vmem>>, vector<12x1xf32>
    %cst_30 = arith.constant dense<0.000000e+00> : vector<12x128xf32>
    %39 = tpu.matmul %37, %35, %cst_30 {dimension_numbers = #tpu.dot_dimension_numbers<[1], [0], [0], [1], [0, 0, 1, 1], [], []>} : vector<12x16xf32>, vector<16x128xf32>, vector<12x128xf32> -> vector<12x128xf32>
    %40 = vector.broadcast %38 : vector<12x1xf32> to vector<12x128xf32>
    %41 = arith.addf %39, %40 : vector<12x128xf32>
    %cst_31 = arith.constant 0.000000e+00 : f32
    %42 = vector.broadcast %cst_31 : f32 to vector<12x128xf32>
    %43 = arith.maximumf %41, %42 : vector<12x128xf32>
    %c0_32 = arith.constant 0 : index
    %c0_33 = arith.constant 0 : index
    %44 = vector.load %arg4[%c0_32, %c0_33] : memref<8x12xf32, #tpu.memory_space<vmem>>, vector<8x12xf32>
    %c0_34 = arith.constant 0 : index
    %c0_35 = arith.constant 0 : index
    %45 = vector.load %arg5[%c0_34, %c0_35] : memref<8x1xf32, #tpu.memory_space<vmem>>, vector<8x1xf32>
    %cst_36 = arith.constant dense<0.000000e+00> : vector<8x128xf32>
    %46 = tpu.matmul %44, %43, %cst_36 {dimension_numbers = #tpu.dot_dimension_numbers<[1], [0], [0], [1], [0, 0, 1, 1], [], []>} : vector<8x12xf32>, vector<12x128xf32>, vector<8x128xf32> -> vector<8x128xf32>
    %47 = vector.broadcast %45 : vector<8x1xf32> to vector<8x128xf32>
    %48 = arith.addf %46, %47 : vector<8x128xf32>
    %cst_37 = arith.constant 0.000000e+00 : f32
    %49 = vector.broadcast %cst_37 : f32 to vector<8x128xf32>
    %50 = arith.maximumf %48, %49 : vector<8x128xf32>
    %c16 = arith.constant 16 : index
    %c0_38 = arith.constant 0 : index
    %51 = vector.load %arg6[%c16, %c0_38] : memref<32x8xf32, #tpu.memory_space<vmem>>, vector<16x8xf32>
    %c16_39 = arith.constant 16 : index
    %c0_40 = arith.constant 0 : index
    %52 = vector.load %arg7[%c16_39, %c0_40] : memref<32x1xf32, #tpu.memory_space<vmem>>, vector<16x1xf32>
    %cst_41 = arith.constant dense<0.000000e+00> : vector<16x128xf32>
    %53 = tpu.matmul %51, %50, %cst_41 {dimension_numbers = #tpu.dot_dimension_numbers<[1], [0], [0], [1], [0, 0, 1, 1], [], []>} : vector<16x8xf32>, vector<8x128xf32>, vector<16x128xf32> -> vector<16x128xf32>
    %54 = vector.broadcast %52 : vector<16x1xf32> to vector<16x128xf32>
    %55 = arith.addf %53, %54 : vector<16x128xf32>
    %cst_42 = arith.constant 0.000000e+00 : f32
    %56 = vector.broadcast %cst_42 : f32 to vector<16x128xf32>
    %57 = arith.maximumf %55, %56 : vector<16x128xf32>
    %c0_43 = arith.constant 0 : index
    %c0_44 = arith.constant 0 : index
    %58 = vector.load %arg10[%c0_43, %c0_44] : memref<16x16xf32, #tpu.memory_space<vmem>>, vector<16x16xf32>
    %c0_45 = arith.constant 0 : index
    %c0_46 = arith.constant 0 : index
    %59 = vector.load %arg11[%c0_45, %c0_46] : memref<16x1xf32, #tpu.memory_space<vmem>>, vector<16x1xf32>
    %cst_47 = arith.constant dense<0.000000e+00> : vector<16x128xf32>
    %60 = tpu.matmul %58, %57, %cst_47 {dimension_numbers = #tpu.dot_dimension_numbers<[1], [0], [0], [1], [0, 0, 1, 1], [], []>} : vector<16x16xf32>, vector<16x128xf32>, vector<16x128xf32> -> vector<16x128xf32>
    %61 = vector.broadcast %59 : vector<16x1xf32> to vector<16x128xf32>
    %62 = arith.addf %60, %61 : vector<16x128xf32>
    %cst_48 = arith.constant 5.000000e-01 : f32
    %63 = vector.broadcast %cst_48 : f32 to vector<16x128xf32>
    %64 = arith.mulf %63, %62 : vector<16x128xf32>
    %65 = math.tanh %64 : vector<16x128xf32>
    %cst_49 = arith.constant 5.000000e-01 : f32
    %66 = vector.broadcast %cst_49 : f32 to vector<16x128xf32>
    %67 = arith.mulf %66, %65 : vector<16x128xf32>
    %cst_50 = arith.constant 5.000000e-01 : f32
    %68 = vector.broadcast %cst_50 : f32 to vector<16x128xf32>
    %69 = arith.addf %67, %68 : vector<16x128xf32>
    %70 = tpu.transpose %35, [1, 0] : vector<16x128xf32> -> vector<128x16xf32>
    %71 = arith.truncf %70 : vector<128x16xf32> to vector<128x16xbf16>
    %c0_51 = arith.constant 0 : index
    %c0_52 = arith.constant 0 : index
    %72 = vector.load %arg12[%c0_51, %c0_52] : memref<128x16xbf16, #tpu.memory_space<vmem>>, vector<128x16xbf16>
    tpu.vector_store %arg12[%c0_51, %c0_52], %71 {strides = array<i32>} : memref<128x16xbf16, #tpu.memory_space<vmem>>, vector<128x16xbf16>,
    %73 = tpu.transpose %36, [1, 0] : vector<16x128xf32> -> vector<128x16xf32>
    %74 = arith.truncf %73 : vector<128x16xf32> to vector<128x16xbf16>
    %c0_53 = arith.constant 0 : index
    %c0_54 = arith.constant 0 : index
    %75 = vector.load %arg13[%c0_53, %c0_54] : memref<128x16xbf16, #tpu.memory_space<vmem>>, vector<128x16xbf16>
    tpu.vector_store %arg13[%c0_53, %c0_54], %74 {strides = array<i32>} : memref<128x16xbf16, #tpu.memory_space<vmem>>, vector<128x16xbf16>,
    %76 = tpu.transpose %69, [1, 0] : vector<16x128xf32> -> vector<128x16xf32>
    %77 = arith.truncf %76 : vector<128x16xf32> to vector<128x16xbf16>
    %c0_55 = arith.constant 0 : index
    %c0_56 = arith.constant 0 : index
    %78 = vector.load %arg14[%c0_55, %c0_56] : memref<128x16xbf16, #tpu.memory_space<vmem>>, vector<128x16xbf16>
    tpu.vector_store %arg14[%c0_55, %c0_56], %77 {strides = array<i32>} : memref<128x16xbf16, #tpu.memory_space<vmem>>, vector<128x16xbf16>,
    return
  }
  func.func @transform_0(%arg0: i32) -> (i32, i32) {
    %c0_i32 = arith.constant 0 : i32
    %c0_i32_0 = arith.constant 0 : i32
    return %arg0, %c0_i32 : i32, i32
  }
  func.func @transform_1(%arg0: i32) -> (i32, i32) {
    %c0_i32 = arith.constant 0 : i32
    %c0_i32_0 = arith.constant 0 : i32
    %c0_i32_1 = arith.constant 0 : i32
    return %c0_i32, %c0_i32_0 : i32, i32
  }
  func.func @transform_2(%arg0: i32) -> (i32, i32) {
    %c0_i32 = arith.constant 0 : i32
    %c0_i32_0 = arith.constant 0 : i32
    %c0_i32_1 = arith.constant 0 : i32
    return %c0_i32, %c0_i32_0 : i32, i32
  }
  func.func @transform_3(%arg0: i32) -> (i32, i32) {
    %c0_i32 = arith.constant 0 : i32
    %c0_i32_0 = arith.constant 0 : i32
    %c0_i32_1 = arith.constant 0 : i32
    return %c0_i32, %c0_i32_0 : i32, i32
  }
  func.func @transform_4(%arg0: i32) -> (i32, i32) {
    %c0_i32 = arith.constant 0 : i32
    %c0_i32_0 = arith.constant 0 : i32
    %c0_i32_1 = arith.constant 0 : i32
    return %c0_i32, %c0_i32_0 : i32, i32
  }
  func.func @transform_5(%arg0: i32) -> (i32, i32) {
    %c0_i32 = arith.constant 0 : i32
    %c0_i32_0 = arith.constant 0 : i32
    %c0_i32_1 = arith.constant 0 : i32
    return %c0_i32, %c0_i32_0 : i32, i32
  }
  func.func @transform_6(%arg0: i32) -> (i32, i32) {
    %c0_i32 = arith.constant 0 : i32
    %c0_i32_0 = arith.constant 0 : i32
    %c0_i32_1 = arith.constant 0 : i32
    return %c0_i32, %c0_i32_0 : i32, i32
  }
  func.func @transform_7(%arg0: i32) -> (i32, i32) {
    %c0_i32 = arith.constant 0 : i32
    %c0_i32_0 = arith.constant 0 : i32
    %c0_i32_1 = arith.constant 0 : i32
    return %c0_i32, %c0_i32_0 : i32, i32
  }
  func.func @transform_8(%arg0: i32) -> (i32, i32) {
    %c0_i32 = arith.constant 0 : i32
    %c0_i32_0 = arith.constant 0 : i32
    %c0_i32_1 = arith.constant 0 : i32
    return %c0_i32, %c0_i32_0 : i32, i32
  }
  func.func @transform_9(%arg0: i32) -> (i32, i32) {
    %c0_i32 = arith.constant 0 : i32
    %c0_i32_0 = arith.constant 0 : i32
    %c0_i32_1 = arith.constant 0 : i32
    return %c0_i32, %c0_i32_0 : i32, i32
  }
  func.func @transform_10(%arg0: i32) -> (i32, i32) {
    %c0_i32 = arith.constant 0 : i32
    %c0_i32_0 = arith.constant 0 : i32
    %c0_i32_1 = arith.constant 0 : i32
    return %c0_i32, %c0_i32_0 : i32, i32
  }
  func.func @transform_11(%arg0: i32) -> (i32, i32) {
    %c0_i32 = arith.constant 0 : i32
    %c0_i32_0 = arith.constant 0 : i32
    return %arg0, %c0_i32 : i32, i32
  }
  func.func @transform_12(%arg0: i32) -> (i32, i32) {
    %c0_i32 = arith.constant 0 : i32
    %c0_i32_0 = arith.constant 0 : i32
    return %arg0, %c0_i32 : i32, i32
  }
  func.func @transform_13(%arg0: i32) -> (i32, i32) {
    %c0_i32 = arith.constant 0 : i32
    %c0_i32_0 = arith.constant 0 : i32
    return %arg0, %c0_i32 : i32, i32
  }
}

</mosaic_0001>

<llo_original>
// kernel: tpu_custom_call.1
$region0: #{tpu_custom_call.1}
  #allocation0 [shape = 'u32[]', space=smem, size = 0x4, offset = 0x4, fixed_abs, tag = 'smem constant byte address 0x4 - core index']
  #allocation1 [shape = 'u32[144,128]{1,0:T(1,128)}', space=vmem, size = 0x12000, scoped, tag = 'internal scratch']
  %s0 = inlined_call_operand.vmem [shape: f32[384,16], index: 0, kind: input, shape index: {}]
  %s1 = inlined_call_operand.vmem [shape: f32[12,16], index: 1, kind: input, shape index: {}]
  %s2 = inlined_call_operand.vmem [shape: f32[12,1], index: 2, kind: input, shape index: {}]
  %s3 = inlined_call_operand.vmem [shape: f32[8,12], index: 3, kind: input, shape index: {}]
  %s4 = inlined_call_operand.vmem [shape: f32[8,1], index: 4, kind: input, shape index: {}]
  %s5 = inlined_call_operand.vmem [shape: f32[32,8], index: 5, kind: input, shape index: {}]
  %s6 = inlined_call_operand.vmem [shape: f32[32,1], index: 6, kind: input, shape index: {}]
  %s7 = inlined_call_operand.vmem [shape: f32[32,32], index: 7, kind: input, shape index: {}]
  %s8 = inlined_call_operand.vmem [shape: f32[32,1], index: 8, kind: input, shape index: {}]
  %s9 = inlined_call_operand.vmem [shape: f32[16,16], index: 9, kind: input, shape index: {}]
  %s10 = inlined_call_operand.vmem [shape: f32[16,1], index: 10, kind: input, shape index: {}]
  %s11 = inlined_call_operand.vmem [shape: bf16[384,16], index: 11, kind: output, shape index: {0}]
  %s12 = inlined_call_operand.vmem [shape: bf16[384,16], index: 12, kind: output, shape index: {1}]
  %s13 = inlined_call_operand.vmem [shape: bf16[384,16], index: 13, kind: output, shape index: {2}]
  %14 = xla_tuple %s11, %s12, %s13
  %s15 = sld [smem:[#allocation0]]
  $region93: #{tpu_custom_call.1} parent=0
    _
  %s17 = ssub.s32 1, %s15
  %s18 = scalar_select 0, %s17, %s15
  loop: start=0, step=1, limit=5
  $region2: #{tpu_custom_call.1} parent=0 // loop_pre_header
    _
  $region3: #{tpu_custom_call.1} parent=0 // loop_header
    %s20 = sphi 0, %s24
    %p21 = scmp.ge.s32.totalorder %s20, 5
    %s30 = sphi 0, %s32
    %s33 = sphi 0, %s30
    %s34 = sphi 0, %s33
    %s50 = sphi 0, %s34
    %s54 = sphi 0, %s54
    %s56 = sphi 0, %s54
    %s57 = sphi 0, %s56
    %s71 = sphi 0, %s57
    %s75 = sphi 0, %s75
    %s77 = sphi 0, %s75
    %s78 = sphi 0, %s77
    %s92 = sphi 0, %s78
    %s96 = sphi 0, %s96
    %s98 = sphi 0, %s96
    %s99 = sphi 0, %s98
    %s113 = sphi 0, %s99
    %s117 = sphi 0, %s117
    %s119 = sphi 0, %s117
    %s120 = sphi 0, %s119
    %s134 = sphi 0, %s120
    %s138 = sphi 0, %s138
    %s140 = sphi 0, %s138
    %s141 = sphi 0, %s140
    %s155 = sphi 0, %s141
    %s159 = sphi 0, %s159
    %s161 = sphi 0, %s159
    %s162 = sphi 0, %s161
    %s176 = sphi 0, %s162
    %s180 = sphi 0, %s180
    %s182 = sphi 0, %s180
    %s183 = sphi 0, %s182
    %s197 = sphi 0, %s183
    %s201 = sphi 0, %s201
    %s203 = sphi 0, %s201
    %s204 = sphi 0, %s203
    %s218 = sphi 0, %s204
    %s222 = sphi 0, %s222
    %s224 = sphi 0, %s222
    %s225 = sphi 0, %s224
    %s239 = sphi 0, %s225
    %s243 = sphi 0, %s243
    %s245 = sphi 0, %s243
    %s246 = sphi 0, %s245
    %s260 = sphi 0, %s246
    %s266 = sphi 0, %s268
    %s269 = sphi 0, %s266
    %s270 = sphi 0, %s269
    %s286 = sphi 0, %s270
    %s292 = sphi 0, %s294
    %s295 = sphi 0, %s292
    %s296 = sphi 0, %s295
    %s312 = sphi 0, %s296
    %s318 = sphi 0, %s320
    %s321 = sphi 0, %s318
    %s322 = sphi 0, %s321
    %s338 = sphi 0, %s322
  $region4: #{tpu_custom_call.1} parent=0 // loop_header_branch
    %23 = sbr.rel (%p21) target = $region8
  $region5: #{tpu_custom_call.1} parent=0 // loop_body
    %s25 = ssub.s32 %s20, 1
    %s26 = ssub.s32 %s20, 2
    %s27 = sadd.s32 %s20, 1
    %s28 = ssub.s32 %s20, %s27
    %p29 = scmp.eq.s32.totalorder %s28, 0
    %s31 = sadd.s32 %s30, 1
    %s32 = scalar_select %p29, %s30, %s31
    %p35 = pneg %p29
    %p36 = scmp.eq.s32.totalorder %s20, 2
    %p37 = por %p35, %p36
    %p38 = scmp.ne.s32.totalorder %s30, %s33
    %p39 = scmp.eq.s32.totalorder %s20, 0
    %p40 = por %p38, %p39
    %p41 = scmp.ne.s32.totalorder %s30, %s33
    %p42 = scmp.eq.s32.totalorder %s25, 2
    %p43 = por %p41, %p42
    %p44 = scmp.ne.s32.totalorder %s33, %s34
    %p45 = scmp.eq.s32.totalorder %s25, 0
    %p46 = por %p44, %p45
    %p47 = scmp.ne.s32.totalorder %s33, %s34
    %p48 = scmp.eq.s32.totalorder %s26, 2
    %p49 = por %p47, %p48
    %p51 = scmp.ne.s32.totalorder %s34, %s50
    %p52 = scmp.eq.s32.totalorder %s26, 0
    %p53 = por %p51, %p52
    %s55 = sadd.s32 %s54, 1
    %p58 = scmp.eq.s32.totalorder %s20, 2
    %p59 = scmp.ne.s32.totalorder %s54, %s56
    %p60 = scmp.eq.s32.totalorder %s20, 0
    %p61 = por %p59, %p60
    %p62 = scmp.ne.s32.totalorder %s54, %s56
    %p63 = scmp.eq.s32.totalorder %s25, 2
    %p64 = por %p62, %p63
    %p65 = scmp.ne.s32.totalorder %s56, %s57
    %p66 = scmp.eq.s32.totalorder %s25, 0
    %p67 = por %p65, %p66
    %p68 = scmp.ne.s32.totalorder %s56, %s57
    %p69 = scmp.eq.s32.totalorder %s26, 2
    %p70 = por %p68, %p69
    %p72 = scmp.ne.s32.totalorder %s57, %s71
    %p73 = scmp.eq.s32.totalorder %s26, 0
    %p74 = por %p72, %p73
    %s76 = sadd.s32 %s75, 1
    %p79 = scmp.eq.s32.totalorder %s20, 2
    %p80 = scmp.ne.s32.totalorder %s75, %s77
    %p81 = scmp.eq.s32.totalorder %s20, 0
    %p82 = por %p80, %p81
    %p83 = scmp.ne.s32.totalorder %s75, %s77
    %p84 = scmp.eq.s32.totalorder %s25, 2
    %p85 = por %p83, %p84
    %p86 = scmp.ne.s32.totalorder %s77, %s78
    %p87 = scmp.eq.s32.totalorder %s25, 0
    %p88 = por %p86, %p87
    %p89 = scmp.ne.s32.totalorder %s77, %s78
    %p90 = scmp.eq.s32.totalorder %s26, 2
    %p91 = por %p89, %p90
    %p93 = scmp.ne.s32.totalorder %s78, %s92
    %p94 = scmp.eq.s32.totalorder %s26, 0
    %p95 = por %p93, %p94
    %s97 = sadd.s32 %s96, 1
    %p100 = scmp.eq.s32.totalorder %s20, 2
    %p101 = scmp.ne.s32.totalorder %s96, %s98
    %p102 = scmp.eq.s32.totalorder %s20, 0
    %p103 = por %p101, %p102
    %p104 = scmp.ne.s32.totalorder %s96, %s98
    %p105 = scmp.eq.s32.totalorder %s25, 2
    %p106 = por %p104, %p105
    %p107 = scmp.ne.s32.totalorder %s98, %s99
    %p108 = scmp.eq.s32.totalorder %s25, 0
    %p109 = por %p107, %p108
    %p110 = scmp.ne.s32.totalorder %s98, %s99
    %p111 = scmp.eq.s32.totalorder %s26, 2
    %p112 = por %p110, %p111
    %p114 = scmp.ne.s32.totalorder %s99, %s113
    %p115 = scmp.eq.s32.totalorder %s26, 0
    %p116 = por %p114, %p115
    %s118 = sadd.s32 %s117, 1
    %p121 = scmp.eq.s32.totalorder %s20, 2
    %p122 = scmp.ne.s32.totalorder %s117, %s119
    %p123 = scmp.eq.s32.totalorder %s20, 0
    %p124 = por %p122, %p123
    %p125 = scmp.ne.s32.totalorder %s117, %s119
    %p126 = scmp.eq.s32.totalorder %s25, 2
    %p127 = por %p125, %p126
    %p128 = scmp.ne.s32.totalorder %s119, %s120
    %p129 = scmp.eq.s32.totalorder %s25, 0
    %p130 = por %p128, %p129
    %p131 = scmp.ne.s32.totalorder %s119, %s120
    %p132 = scmp.eq.s32.totalorder %s26, 2
    %p133 = por %p131, %p132
    %p135 = scmp.ne.s32.totalorder %s120, %s134
    %p136 = scmp.eq.s32.totalorder %s26, 0
    %p137 = por %p135, %p136
    %s139 = sadd.s32 %s138, 1
    %p142 = scmp.eq.s32.totalorder %s20, 2
    %p143 = scmp.ne.s32.totalorder %s138, %s140
    %p144 = scmp.eq.s32.totalorder %s20, 0
    %p145 = por %p143, %p144
    %p146 = scmp.ne.s32.totalorder %s138, %s140
    %p147 = scmp.eq.s32.totalorder %s25, 2
    %p148 = por %p146, %p147
    %p149 = scmp.ne.s32.totalorder %s140, %s141
    %p150 = scmp.eq.s32.totalorder %s25, 0
    %p151 = por %p149, %p150
    %p152 = scmp.ne.s32.totalorder %s140, %s141
    %p153 = scmp.eq.s32.totalorder %s26, 2
    %p154 = por %p152, %p153
    %p156 = scmp.ne.s32.totalorder %s141, %s155
    %p157 = scmp.eq.s32.totalorder %s26, 0
    %p158 = por %p156, %p157
    %s160 = sadd.s32 %s159, 1
    %p163 = scmp.eq.s32.totalorder %s20, 2
    %p164 = scmp.ne.s32.totalorder %s159, %s161
    %p165 = scmp.eq.s32.totalorder %s20, 0
    %p166 = por %p164, %p165
    %p167 = scmp.ne.s32.totalorder %s159, %s161
    %p168 = scmp.eq.s32.totalorder %s25, 2
    %p169 = por %p167, %p168
    %p170 = scmp.ne.s32.totalorder %s161, %s162
    %p171 = scmp.eq.s32.totalorder %s25, 0
    %p172 = por %p170, %p171
    %p173 = scmp.ne.s32.totalorder %s161, %s162
    %p174 = scmp.eq.s32.totalorder %s26, 2
    %p175 = por %p173, %p174
    %p177 = scmp.ne.s32.totalorder %s162, %s176
    %p178 = scmp.eq.s32.totalorder %s26, 0
    %p179 = por %p177, %p178
    %s181 = sadd.s32 %s180, 1
    %p184 = scmp.eq.s32.totalorder %s20, 2
    %p185 = scmp.ne.s32.totalorder %s180, %s182
    %p186 = scmp.eq.s32.totalorder %s20, 0
    %p187 = por %p185, %p186
    %p188 = scmp.ne.s32.totalorder %s180, %s182
    %p189 = scmp.eq.s32.totalorder %s25, 2
    %p190 = por %p188, %p189
    %p191 = scmp.ne.s32.totalorder %s182, %s183
    %p192 = scmp.eq.s32.totalorder %s25, 0
    %p193 = por %p191, %p192
    %p194 = scmp.ne.s32.totalorder %s182, %s183
    %p195 = scmp.eq.s32.totalorder %s26, 2
    %p196 = por %p194, %p195
    %p198 = scmp.ne.s32.totalorder %s183, %s197
    %p199 = scmp.eq.s32.totalorder %s26, 0
    %p200 = por %p198, %p199
    %s202 = sadd.s32 %s201, 1
    %p205 = scmp.eq.s32.totalorder %s20, 2
    %p206 = scmp.ne.s32.totalorder %s201, %s203
    %p207 = scmp.eq.s32.totalorder %s20, 0
    %p208 = por %p206, %p207
    %p209 = scmp.ne.s32.totalorder %s201, %s203
    %p210 = scmp.eq.s32.totalorder %s25, 2
    %p211 = por %p209, %p210
    %p212 = scmp.ne.s32.totalorder %s203, %s204
    %p213 = scmp.eq.s32.totalorder %s25, 0
    %p214 = por %p212, %p213
    %p215 = scmp.ne.s32.totalorder %s203, %s204
    %p216 = scmp.eq.s32.totalorder %s26, 2
    %p217 = por %p215, %p216
    %p219 = scmp.ne.s32.totalorder %s204, %s218
    %p220 = scmp.eq.s32.totalorder %s26, 0
    %p221 = por %p219, %p220
    %s223 = sadd.s32 %s222, 1
    %p226 = scmp.eq.s32.totalorder %s20, 2
    %p227 = scmp.ne.s32.totalorder %s222, %s224
    %p228 = scmp.eq.s32.totalorder %s20, 0
    %p229 = por %p227, %p228
    %p230 = scmp.ne.s32.totalorder %s222, %s224
    %p231 = scmp.eq.s32.totalorder %s25, 2
    %p232 = por %p230, %p231
    %p233 = scmp.ne.s32.totalorder %s224, %s225
    %p234 = scmp.eq.s32.totalorder %s25, 0
    %p235 = por %p233, %p234
    %p236 = scmp.ne.s32.totalorder %s224, %s225
    %p237 = scmp.eq.s32.totalorder %s26, 2
    %p238 = por %p236, %p237
    %p240 = scmp.ne.s32.totalorder %s225, %s239
    %p241 = scmp.eq.s32.totalorder %s26, 0
    %p242 = por %p240, %p241
    %s244 = sadd.s32 %s243, 1
    %p247 = scmp.eq.s32.totalorder %s20, 2
    %p248 = scmp.ne.s32.totalorder %s243, %s245
    %p249 = scmp.eq.s32.totalorder %s20, 0
    %p250 = por %p248, %p249
    %p251 = scmp.ne.s32.totalorder %s243, %s245
    %p252 = scmp.eq.s32.totalorder %s25, 2
    %p253 = por %p251, %p252
    %p254 = scmp.ne.s32.totalorder %s245, %s246
    %p255 = scmp.eq.s32.totalorder %s25, 0
    %p256 = por %p254, %p255
    %p257 = scmp.ne.s32.totalorder %s245, %s246
    %p258 = scmp.eq.s32.totalorder %s26, 2
    %p259 = por %p257, %p258
    %p261 = scmp.ne.s32.totalorder %s246, %s260
    %p262 = scmp.eq.s32.totalorder %s26, 0
    %p263 = por %p261, %p262
    %s264 = ssub.s32 %s20, %s27
    %p265 = scmp.eq.s32.totalorder %s264, 0
    %s267 = sadd.s32 %s266, 1
    %s268 = scalar_select %p265, %s266, %s267
    %p271 = pneg %p265
    %p272 = scmp.eq.s32.totalorder %s20, 2
    %p273 = por %p271, %p272
    %p274 = scmp.ne.s32.totalorder %s266, %s269
    %p275 = scmp.eq.s32.totalorder %s20, 0
    %p276 = por %p274, %p275
    %p277 = scmp.ne.s32.totalorder %s266, %s269
    %p278 = scmp.eq.s32.totalorder %s25, 2
    %p279 = por %p277, %p278
    %p280 = scmp.ne.s32.totalorder %s269, %s270
    %p281 = scmp.eq.s32.totalorder %s25, 0
    %p282 = por %p280, %p281
    %p283 = scmp.ne.s32.totalorder %s269, %s270
    %p284 = scmp.eq.s32.totalorder %s26, 2
    %p285 = por %p283, %p284
    %p287 = scmp.ne.s32.totalorder %s270, %s286
    %p288 = scmp.eq.s32.totalorder %s26, 0
    %p289 = por %p287, %p288
    %s290 = ssub.s32 %s20, %s27
    %p291 = scmp.eq.s32.totalorder %s290, 0
    %s293 = sadd.s32 %s292, 1
    %s294 = scalar_select %p291, %s292, %s293
    %p297 = pneg %p291
    %p298 = scmp.eq.s32.totalorder %s20, 2
    %p299 = por %p297, %p298
    %p300 = scmp.ne.s32.totalorder %s292, %s295
    %p301 = scmp.eq.s32.totalorder %s20, 0
    %p302 = por %p300, %p301
    %p303 = scmp.ne.s32.totalorder %s292, %s295
    %p304 = scmp.eq.s32.totalorder %s25, 2
    %p305 = por %p303, %p304
    %p306 = scmp.ne.s32.totalorder %s295, %s296
    %p307 = scmp.eq.s32.totalorder %s25, 0
    %p308 = por %p306, %p307
    %p309 = scmp.ne.s32.totalorder %s295, %s296
    %p310 = scmp.eq.s32.totalorder %s26, 2
    %p311 = por %p309, %p310
    %p313 = scmp.ne.s32.totalorder %s296, %s312
    %p314 = scmp.eq.s32.totalorder %s26, 0
    %p315 = por %p313, %p314
    %s316 = ssub.s32 %s20, %s27
    %p317 = scmp.eq.s32.totalorder %s316, 0
    %s319 = sadd.s32 %s318, 1
    %s320 = scalar_select %p317, %s318, %s319
    %p323 = pneg %p317
    %p324 = scmp.eq.s32.totalorder %s20, 2
    %p325 = por %p323, %p324
    %p326 = scmp.ne.s32.totalorder %s318, %s321
    %p327 = scmp.eq.s32.totalorder %s20, 0
    %p328 = por %p326, %p327
    %p329 = scmp.ne.s32.totalorder %s318, %s321
    %p330 = scmp.eq.s32.totalorder %s25, 2
    %p331 = por %p329, %p330
    %p332 = scmp.ne.s32.totalorder %s321, %s322
    %p333 = scmp.eq.s32.totalorder %s25, 0
    %p334 = por %p332, %p333
    %p335 = scmp.ne.s32.totalorder %s321, %s322
    %p336 = scmp.eq.s32.totalorder %s26, 2
    %p337 = por %p335, %p336
    %p339 = scmp.ne.s32.totalorder %s322, %s338
    %p340 = scmp.eq.s32.totalorder %s26, 0
    %p341 = por %p339, %p340
    %p342 = scmp.le.s32.totalorder 1, %s20
    %p343 = scmp.lt.s32.totalorder %s20, 4
    %p344 = pnand %p342, %p343
    %p345 = pneg %p344
    // Predicated region
    $region9: #{tpu_custom_call.1} parent=5 // pred_check
      _
    $region10: #{tpu_custom_call.1} parent=5 // pred_check_branch
      %347 = sbr.rel (%p344) target = $region12
    $region11: #{tpu_custom_call.1} parent=5 // pred_region
      %s348 = ssub.s32 %s20, 1
      // Predicated region
      $region13: #{tpu_custom_call.1} parent=11 // pred_check
        %p349 = pneg %p67
      $region14: #{tpu_custom_call.1} parent=11 // pred_check_branch
        %351 = sbr.rel (%p349) target = $region16
      $region15: #{tpu_custom_call.1} parent=11 // pred_region
        _
      $region16: #{tpu_custom_call.1} parent=11 // pred_fallthru
        _
      // Predicated region
      $region17: #{tpu_custom_call.1} parent=11 // pred_check
        %p352 = pneg %p88
      $region18: #{tpu_custom_call.1} parent=11 // pred_check_branch
        %354 = sbr.rel (%p352) target = $region20
      $region19: #{tpu_custom_call.1} parent=11 // pred_region
        _
      $region20: #{tpu_custom_call.1} parent=11 // pred_fallthru
        _
      // Predicated region
      $region21: #{tpu_custom_call.1} parent=11 // pred_check
        %p355 = pneg %p109
      $region22: #{tpu_custom_call.1} parent=11 // pred_check_branch
        %357 = sbr.rel (%p355) target = $region24
      $region23: #{tpu_custom_call.1} parent=11 // pred_region
        _
      $region24: #{tpu_custom_call.1} parent=11 // pred_fallthru
        _
      // Predicated region
      $region25: #{tpu_custom_call.1} parent=11 // pred_check
        %p358 = pneg %p130
      $region26: #{tpu_custom_call.1} parent=11 // pred_check_branch
        %360 = sbr.rel (%p358) target = $region28
      $region27: #{tpu_custom_call.1} parent=11 // pred_region
        _
      $region28: #{tpu_custom_call.1} parent=11 // pred_fallthru
        _
      // Predicated region
      $region29: #{tpu_custom_call.1} parent=11 // pred_check
        %p361 = pneg %p151
      $region30: #{tpu_custom_call.1} parent=11 // pred_check_branch
        %363 = sbr.rel (%p361) target = $region32
      $region31: #{tpu_custom_call.1} parent=11 // pred_region
        _
      $region32: #{tpu_custom_call.1} parent=11 // pred_fallthru
        _
      // Predicated region
      $region33: #{tpu_custom_call.1} parent=11 // pred_check
        %p364 = pneg %p172
      $region34: #{tpu_custom_call.1} parent=11 // pred_check_branch
        %366 = sbr.rel (%p364) target = $region36
      $region35: #{tpu_custom_call.1} parent=11 // pred_region
        _
      $region36: #{tpu_custom_call.1} parent=11 // pred_fallthru
        _
      // Predicated region
      $region37: #{tpu_custom_call.1} parent=11 // pred_check
        %p367 = pneg %p193
      $region38: #{tpu_custom_call.1} parent=11 // pred_check_branch
        %369 = sbr.rel (%p367) target = $region40
      $region39: #{tpu_custom_call.1} parent=11 // pred_region
        _
      $region40: #{tpu_custom_call.1} parent=11 // pred_fallthru
        _
      // Predicated region
      $region41: #{tpu_custom_call.1} parent=11 // pred_check
        %p370 = pneg %p214
      $region42: #{tpu_custom_call.1} parent=11 // pred_check_branch
        %372 = sbr.rel (%p370) target = $region44
      $region43: #{tpu_custom_call.1} parent=11 // pred_region
        _
      $region44: #{tpu_custom_call.1} parent=11 // pred_fallthru
        _
      // Predicated region
      $region45: #{tpu_custom_call.1} parent=11 // pred_check
        %p373 = pneg %p235
      $region46: #{tpu_custom_call.1} parent=11 // pred_check_branch
        %375 = sbr.rel (%p373) target = $region48
      $region47: #{tpu_custom_call.1} parent=11 // pred_region
        _
      $region48: #{tpu_custom_call.1} parent=11 // pred_fallthru
        _
      // Predicated region
      $region49: #{tpu_custom_call.1} parent=11 // pred_check
        %p376 = pneg %p256
      $region50: #{tpu_custom_call.1} parent=11 // pred_check_branch
        %378 = sbr.rel (%p376) target = $region52
      $region51: #{tpu_custom_call.1} parent=11 // pred_region
        _
      $region52: #{tpu_custom_call.1} parent=11 // pred_fallthru
        _
    $region12: #{tpu_custom_call.1} parent=5 // pred_fallthru
      _
    %p379 = scmp.lt.s32.totalorder %s20, 3
    // Predicated region
    $region53: #{tpu_custom_call.1} parent=5 // pred_check
      %p380 = pneg %p379
    $region54: #{tpu_custom_call.1} parent=5 // pred_check_branch
      %382 = sbr.rel (%p380) target = $region56
    $region55: #{tpu_custom_call.1} parent=5 // pred_region
      // Predicated region
      $region57: #{tpu_custom_call.1} parent=55 // pred_check
        %p383 = pneg %p40
      $region58: #{tpu_custom_call.1} parent=55 // pred_check_branch
        %385 = sbr.rel (%p383) target = $region60
      $region59: #{tpu_custom_call.1} parent=55 // pred_region
        %s386 = smul.u32 16, %s20
        %p387 = scmp.lt.s32.totalorder %s386, 47
        %s388 = scalar_select %p387, %s386, 47
        %s389 = smul.addr %s388, 8
        %s390 = scalar_lea.vmem %s0, %s389
        %s391 = smul.u32 16, %s20
      $region60: #{tpu_custom_call.1} parent=55 // pred_fallthru
        _
    $region56: #{tpu_custom_call.1} parent=5 // pred_fallthru
      _
    %p392 = scmp.le.s32.totalorder 1, %s20
    %p393 = scmp.lt.s32.totalorder %s20, 4
    %p394 = pnand %p392, %p393
    %p395 = pneg %p394
    // Predicated region
    $region61: #{tpu_custom_call.1} parent=5 // pred_check
      _
    $region62: #{tpu_custom_call.1} parent=5 // pred_check_branch
      %397 = sbr.rel (%p394) target = $region64
    $region63: #{tpu_custom_call.1} parent=5 // pred_region
      %s398 = ssub.s32 %s20, 1
      %s399 = smul.u32 16, %s25
      %p400 = scmp.lt.s32.totalorder %s399, 47
      %s401 = scalar_select %p400, %s399, 47
      %s402 = smul.addr %s401, 8
      %s403 = scalar_lea.vmem %s0, %s402
      %p404 = pneg %p46
      %p405 = pneg %p43
      %p406 = pneg %p67
      %p407 = pneg %p64
      %p408 = pneg %p88
      %p409 = pneg %p85
      %p410 = pneg %p109
      %p411 = pneg %p106
      %p412 = pneg %p130
      %p413 = pneg %p127
      %p414 = pneg %p151
      %p415 = pneg %p148
      %p416 = pneg %p172
      %p417 = pneg %p169
      %p418 = pneg %p193
      %p419 = pneg %p190
      %p420 = pneg %p214
      %p421 = pneg %p211
      %p422 = pneg %p235
      %p423 = pneg %p232
      %p424 = pneg %p256
      %p425 = pneg %p253
      %p426 = pneg %p282
      %p427 = pneg %p279
      %s428 = smul.u32 16, %s25
      %p429 = scmp.lt.s32.totalorder %s428, 47
      %s430 = scalar_select %p429, %s428, 47
      %s431 = smul.addr %s430, 4
      %s432 = scalar_lea.vmem %s11, %s431
      %p433 = pneg %p308
      %p434 = pneg %p305
      %s435 = smul.u32 16, %s25
      %p436 = scmp.lt.s32.totalorder %s435, 47
      %s437 = scalar_select %p436, %s435, 47
      %s438 = smul.addr %s437, 4
      %s439 = scalar_lea.vmem %s12, %s438
      %p440 = pneg %p334
      %p441 = pneg %p331
      %s442 = smul.u32 16, %s25
      %p443 = scmp.lt.s32.totalorder %s442, 47
      %s444 = scalar_select %p443, %s442, 47
      %s445 = smul.addr %s444, 4
      %s446 = scalar_lea.vmem %s13, %s445
      %s447 = smul.u32 16, %s25
      %p448 = scmp.lt.s32.totalorder %s447, 47
      %s449 = scalar_select %p448, %s447, 47
      %s450 = smul.addr %s449, 8
      %s451 = scalar_lea.vmem %s0, %s450
      %s452 = smul.u32 16, %s25
      %s453 = smul.u32 16, %s25
      %p454 = scmp.lt.s32.totalorder %s453, 47
      %s455 = scalar_select %p454, %s453, 47
      %s456 = smul.addr %s455, 4
      %s457 = scalar_lea.vmem %s11, %s456
      %s458 = smul.u32 16, %s25
      %s459 = smul.u32 16, %s25
      %p460 = scmp.lt.s32.totalorder %s459, 47
      %s461 = scalar_select %p460, %s459, 47
      %s462 = smul.addr %s461, 4
      %s463 = scalar_lea.vmem %s12, %s462
      %s464 = smul.u32 16, %s25
      %s465 = smul.u32 16, %s25
      %p466 = scmp.lt.s32.totalorder %s465, 47
      %s467 = scalar_select %p466, %s465, 47
      %s468 = smul.addr %s467, 4
      %s469 = scalar_lea.vmem %s13, %s468
      %s470 = smul.u32 16, %s25
      %v471 = vld [vmem:[%s451] sm:$0xff]
      %v472 = vld [vmem:[%s451 + $0x8] sm:$0xff]
      %v473 = vld [vmem:[%s451 + $0x10] sm:$0xff]
      %v474 = vld [vmem:[%s451 + $0x18] sm:$0xff]
      %v475 = vld [vmem:[%s451 + $0x20] sm:$0xff]
      %v476 = vld [vmem:[%s451 + $0x28] sm:$0xff]
      %v477 = vld [vmem:[%s451 + $0x30] sm:$0xff]
      %v478 = vld [vmem:[%s451 + $0x38] sm:$0xff]
      %v479 = vld [vmem:[%s451 + $0x40] sm:$0xff]
      %v480 = vld [vmem:[%s451 + $0x48] sm:$0xff]
      %v481 = vld [vmem:[%s451 + $0x50] sm:$0xff]
      %v482 = vld [vmem:[%s451 + $0x58] sm:$0xff]
      %v483 = vld [vmem:[%s451 + $0x60] sm:$0xff]
      %v484 = vld [vmem:[%s451 + $0x68] sm:$0xff]
      %v485 = vld [vmem:[%s451 + $0x70] sm:$0xff]
      %v486 = vld [vmem:[%s451 + $0x78] sm:$0xff]
      %v487 = vld [vmem:[%s1] sm:$0xff]
      %v488 = vld [vmem:[%s1 + $0x8] sm:$0xf]
      %v489 = vld [vmem:[%s2] sm:$0xff]
      %v490 = vld [vmem:[%s2 + $0x8] sm:$0xf]
      %492 = vset.pattern.permute.xlu0 0
      %493 = vperm.xlu0 %492, %v489
      %v494 = vpop.permute.xlu0 %493
      %497 = vset.pattern.permute.xlu0 0
      %498 = vperm.xlu0 %497, %v490
      %v499 = vpop.permute.xlu0 %498
      %vm501 = vcmask 130048
      %v503 = vsel %vm501, %v487, 0
      %v506 = vsel %vm501, %v488, 0
      %v509 = vsel %vm501, %v471, 0
      %v512 = vsel %vm501, %v472, 0
      %v515 = vsel %vm501, %v473, 0
      %v518 = vsel %vm501, %v474, 0
      %v521 = vsel %vm501, %v475, 0
      %v524 = vsel %vm501, %v476, 0
      %v527 = vsel %vm501, %v477, 0
      %v530 = vsel %vm501, %v478, 0
      %v533 = vsel %vm501, %v479, 0
      %v536 = vsel %vm501, %v480, 0
      %v539 = vsel %vm501, %v481, 0
      %v542 = vsel %vm501, %v482, 0
      %v545 = vsel %vm501, %v483, 0
      %v548 = vsel %vm501, %v484, 0
      %v551 = vsel %vm501, %v485, 0
      %v554 = vsel %vm501, %v486, 0
      %556 = vmatprep.subr.mxu0 0.0
      %557 = vmatpush1.xpose.msra.mxu0 %v554
      %558 = vmatprep.subr.mxu0 0.0
      %559 = vmatpush1.xpose.msra.mxu0 %v551
      %560 = vmatprep.subr.mxu0 0.0
      %561 = vmatpush1.xpose.msra.mxu0 %v548
      %562 = vmatprep.subr.mxu0 0.0
      %563 = vmatpush1.xpose.msra.mxu0 %v545
      %564 = vmatprep.subr.mxu0 0.0
      %565 = vmatpush1.xpose.msra.mxu0 %v542
      %566 = vmatprep.subr.mxu0 0.0
      %567 = vmatpush1.xpose.msra.mxu0 %v539
      %568 = vmatprep.subr.mxu0 0.0
      %569 = vmatpush1.xpose.msra.mxu0 %v536
      %570 = vmatprep.subr.mxu0 0.0
      %571 = vmatpush1.xpose.msra.mxu0 %v533
      %572 = vmatprep.subr.mxu0 0.0
      %573 = vmatpush1.xpose.msra.mxu0 %v530
      %574 = vmatprep.subr.mxu0 0.0
      %575 = vmatpush1.xpose.msra.mxu0 %v527
      %576 = vmatprep.subr.mxu0 0.0
      %577 = vmatpush1.xpose.msra.mxu0 %v524
      %578 = vmatprep.subr.mxu0 0.0
      %579 = vmatpush1.xpose.msra.mxu0 %v521
      %580 = vmatprep.subr.mxu0 0.0
      %581 = vmatpush1.xpose.msra.mxu0 %v518
      %582 = vmatprep.subr.mxu0 0.0
      %583 = vmatpush1.xpose.msra.mxu0 %v515
      %584 = vmatprep.subr.mxu0 0.0
      %585 = vmatpush1.xpose.msra.mxu0 %v512
      %586 = vmatprep.subr.mxu0 0.0
      %587 = vmatpush1.xpose.msra.mxu0 %v509
      %588 = vmatprep.subr.mxu0 0.0
      %589 = vmatpush2.xpose.msra.mxu0 0.0
      %590 = vmatprep.subr.mxu0 0.0
      %591 = vmatpush2.xpose.msra.mxu0 0.0
      %592 = vmatprep.subr.mxu0 0.0
      %593 = vmatpush2.xpose.msra.mxu0 0.0
      %594 = vmatprep.subr.mxu0 0.0
      %595 = vmatpush2.xpose.msra.mxu0 0.0
      %596 = vmatprep.subr.mxu0 0.0
      %597 = vmatpush2.xpose.msra.mxu0 0.0
      %598 = vmatprep.subr.mxu0 0.0
      %599 = vmatpush2.xpose.msra.mxu0 0.0
      %600 = vmatprep.subr.mxu0 0.0
      %601 = vmatpush2.xpose.msra.mxu0 0.0
      %602 = vmatprep.subr.mxu0 0.0
      %603 = vmatpush2.xpose.msra.mxu0 0.0
      %604 = vmatprep.subr.mxu0 0.0
      %605 = vmatpush2.xpose.msra.mxu0 0.0
      %606 = vmatprep.subr.mxu0 0.0
      %607 = vmatpush2.xpose.msra.mxu0 0.0
      %608 = vmatprep.subr.mxu0 0.0
      %609 = vmatpush2.xpose.msra.mxu0 0.0
      %610 = vmatprep.subr.mxu0 0.0
      %611 = vmatpush2.xpose.msra.mxu0 0.0
      %612 = vmatprep.subr.mxu0 0.0
      %613 = vmatpush2.xpose.msra.mxu0 0.0
      %614 = vmatprep.subr.mxu0 0.0
      %615 = vmatpush2.xpose.msra.mxu0 0.0
      %616 = vmatprep.subr.mxu0 0.0
      %617 = vmatpush2.xpose.msra.mxu0 0.0
      %618 = vmatprep.subr.mxu0 0.0
      %619 = vmatpush2.xpose.msra.mxu0 0.0
      %620 = vmatprep.mubr.f32.mxu0 0.0
      %621 = vmatmul.mubr.f32.gmra.mxu0 %v503
      %v622 = vpop.f32.mrf.mxu0
      %v623 = vadd.f32 %v494, %v622
      %v624 = vpop.f32.mrf.mxu0
      %625 = vmatprep.mubr.f32.mxu0 0.0
      %626 = vmatmul.mubr.f32.gmra.mxu0 %v506
      %v627 = vpop.f32.mrf.mxu0
      %v628 = vadd.f32 %v499, %v627
      %v629 = vpop.f32.mrf.mxu0
      %630 = vdwg.mxu0
      %v631 = vmax.f32 %v623, 0.0
      %v632 = vmax.f32 %v628, 0.0
      %v633 = vld [vmem:[%s3] sm:$0xff]
      %v634 = vld [vmem:[%s4] sm:$0xff]
      %636 = vset.pattern.permute.xlu0 0
      %637 = vperm.xlu0 %636, %v634
      %v638 = vpop.permute.xlu0 %637
      %vm640 = vcmask 97280
      %v642 = vsel %vm640, %v633, 0
      %vm644 = vcmask 1043456
      %v646 = vsel %vm644, %v632, 0
      %648 = vmatprep.subr.mxu0 0.0
      %649 = vmatpush1.msra.mxu0 0.0
      %650 = vmatprep.subr.mxu0 0.0
      %651 = vmatpush1.msra.mxu0 0.0
      %652 = vmatprep.subr.mxu0 0.0
      %653 = vmatpush1.msra.mxu0 0.0
      %654 = vmatprep.subr.mxu0 0.0
      %655 = vmatpush1.msra.mxu0 0.0
      %656 = vmatprep.subr.mxu0 0.0
      %657 = vmatpush1.msra.mxu0 0.0
      %658 = vmatprep.subr.mxu0 0.0
      %659 = vmatpush1.msra.mxu0 0.0
      %660 = vmatprep.subr.mxu0 0.0
      %661 = vmatpush1.msra.mxu0 0.0
      %662 = vmatprep.subr.mxu0 0.0
      %663 = vmatpush1.msra.mxu0 0.0
      %664 = vmatprep.subr.mxu0 0.0
      %665 = vmatpush1.msra.mxu0 0.0
      %666 = vmatprep.subr.mxu0 0.0
      %667 = vmatpush1.msra.mxu0 0.0
      %668 = vmatprep.subr.mxu0 0.0
      %669 = vmatpush1.msra.mxu0 0.0
      %670 = vmatprep.subr.mxu0 0.0
      %671 = vmatpush1.msra.mxu0 0.0
      %672 = vmatprep.subr.mxu0 0.0
      %673 = vmatpush1.msra.mxu0 0.0
      %674 = vmatprep.subr.mxu0 0.0
      %675 = vmatpush1.msra.mxu0 0.0
      %676 = vmatprep.subr.mxu0 0.0
      %677 = vmatpush1.msra.mxu0 %v646
      %678 = vmatprep.subr.mxu0 0.0
      %679 = vmatpush1.msra.mxu0 %v631
      %680 = vmatprep.subr.mxu0 0.0
      %681 = vmatpush2.msra.mxu0 0.0
      %682 = vmatprep.subr.mxu0 0.0
      %683 = vmatpush2.msra.mxu0 0.0
      %684 = vmatprep.subr.mxu0 0.0
      %685 = vmatpush2.msra.mxu0 0.0
      %686 = vmatprep.subr.mxu0 0.0
      %687 = vmatpush2.msra.mxu0 0.0
      %688 = vmatprep.subr.mxu0 0.0
      %689 = vmatpush2.msra.mxu0 0.0
      %690 = vmatprep.subr.mxu0 0.0
      %691 = vmatpush2.msra.mxu0 0.0
      %692 = vmatprep.subr.mxu0 0.0
      %693 = vmatpush2.msra.mxu0 0.0
      %694 = vmatprep.subr.mxu0 0.0
      %695 = vmatpush2.msra.mxu0 0.0
      %696 = vmatprep.subr.mxu0 0.0
      %697 = vmatpush2.msra.mxu0 0.0
      %698 = vmatprep.subr.mxu0 0.0
      %699 = vmatpush2.msra.mxu0 0.0
      %700 = vmatprep.subr.mxu0 0.0
      %701 = vmatpush2.msra.mxu0 0.0
      %702 = vmatprep.subr.mxu0 0.0
      %703 = vmatpush2.msra.mxu0 0.0
      %704 = vmatprep.subr.mxu0 0.0
      %705 = vmatpush2.msra.mxu0 0.0
      %706 = vmatprep.subr.mxu0 0.0
      %707 = vmatpush2.msra.mxu0 0.0
      %708 = vmatprep.subr.mxu0 0.0
      %709 = vmatpush2.msra.mxu0 0.0
      %710 = vmatprep.subr.mxu0 0.0
      %711 = vmatpush2.msra.mxu0 0.0
      %712 = vmatprep.mubr.f32.mxu0 0.0
      %713 = vmatmul.mubr.f32.gmra.mxu0 %v642
      %v714 = vpop.f32.mrf.mxu0
      %v715 = vadd.f32 %v638, %v714
      %v716 = vpop.f32.mrf.mxu0
      %717 = vdwg.mxu0
      %v718 = vmax.f32 %v715, 0.0
      %v719 = vld [vmem:[%s5] sm:$0xff]
      %v720 = vld [vmem:[%s5 + $0x8] sm:$0xff]
      %v721 = vld [vmem:[%s5 + $0x10] sm:$0xff]
      %v722 = vld [vmem:[%s5 + $0x18] sm:$0xff]
      %v723 = vld [vmem:[%s6] sm:$0xff]
      %v724 = vld [vmem:[%s6 + $0x8] sm:$0xff]
      %v725 = vld [vmem:[%s6 + $0x10] sm:$0xff]
      %v726 = vld [vmem:[%s6 + $0x18] sm:$0xff]
      %728 = vset.pattern.permute.xlu0 0
      %729 = vperm.xlu0 %728, %v723
      %v730 = vpop.permute.xlu0 %729
      %733 = vset.pattern.permute.xlu0 0
      %734 = vperm.xlu0 %733, %v724
      %v735 = vpop.permute.xlu0 %734
      %738 = vset.pattern.permute.xlu0 0
      %739 = vperm.xlu0 %738, %v725
      %v740 = vpop.permute.xlu0 %739
      %743 = vset.pattern.permute.xlu0 0
      %744 = vperm.xlu0 %743, %v726
      %v745 = vpop.permute.xlu0 %744
      %vm747 = vcmask 64512
      %v749 = vsel %vm747, %v719, 0
      %v752 = vsel %vm747, %v720, 0
      %v755 = vsel %vm747, %v721, 0
      %v758 = vsel %vm747, %v722, 0
      %760 = vmatprep.subr.mxu0 0.0
      %761 = vmatpush1.msra.mxu0 0.0
      %762 = vmatprep.subr.mxu0 0.0
      %763 = vmatpush1.msra.mxu0 0.0
      %764 = vmatprep.subr.mxu0 0.0
      %765 = vmatpush1.msra.mxu0 0.0
      %766 = vmatprep.subr.mxu0 0.0
      %767 = vmatpush1.msra.mxu0 0.0
      %768 = vmatprep.subr.mxu0 0.0
      %769 = vmatpush1.msra.mxu0 0.0
      %770 = vmatprep.subr.mxu0 0.0
      %771 = vmatpush1.msra.mxu0 0.0
      %772 = vmatprep.subr.mxu0 0.0
      %773 = vmatpush1.msra.mxu0 0.0
      %774 = vmatprep.subr.mxu0 0.0
      %775 = vmatpush1.msra.mxu0 0.0
      %776 = vmatprep.subr.mxu0 0.0
      %777 = vmatpush1.msra.mxu0 0.0
      %778 = vmatprep.subr.mxu0 0.0
      %779 = vmatpush1.msra.mxu0 0.0
      %780 = vmatprep.subr.mxu0 0.0
      %781 = vmatpush1.msra.mxu0 0.0
      %782 = vmatprep.subr.mxu0 0.0
      %783 = vmatpush1.msra.mxu0 0.0
      %784 = vmatprep.subr.mxu0 0.0
      %785 = vmatpush1.msra.mxu0 0.0
      %786 = vmatprep.subr.mxu0 0.0
      %787 = vmatpush1.msra.mxu0 0.0
      %788 = vmatprep.subr.mxu0 0.0
      %789 = vmatpush1.msra.mxu0 0.0
      %790 = vmatprep.subr.mxu0 0.0
      %791 = vmatpush1.msra.mxu0 %v718
      %792 = vmatprep.subr.mxu0 0.0
      %793 = vmatpush2.msra.mxu0 0.0
      %794 = vmatprep.subr.mxu0 0.0
      %795 = vmatpush2.msra.mxu0 0.0
      %796 = vmatprep.subr.mxu0 0.0
      %797 = vmatpush2.msra.mxu0 0.0
      %798 = vmatprep.subr.mxu0 0.0
      %799 = vmatpush2.msra.mxu0 0.0
      %800 = vmatprep.subr.mxu0 0.0
      %801 = vmatpush2.msra.mxu0 0.0
      %802 = vmatprep.subr.mxu0 0.0
      %803 = vmatpush2.msra.mxu0 0.0
      %804 = vmatprep.subr.mxu0 0.0
      %805 = vmatpush2.msra.mxu0 0.0
      %806 = vmatprep.subr.mxu0 0.0
      %807 = vmatpush2.msra.mxu0 0.0
      %808 = vmatprep.subr.mxu0 0.0
      %809 = vmatpush2.msra.mxu0 0.0
      %810 = vmatprep.subr.mxu0 0.0
      %811 = vmatpush2.msra.mxu0 0.0
      %812 = vmatprep.subr.mxu0 0.0
      %813 = vmatpush2.msra.mxu0 0.0
      %814 = vmatprep.subr.mxu0 0.0
      %815 = vmatpush2.msra.mxu0 0.0
      %816 = vmatprep.subr.mxu0 0.0
      %817 = vmatpush2.msra.mxu0 0.0
      %818 = vmatprep.subr.mxu0 0.0
      %819 = vmatpush2.msra.mxu0 0.0
      %820 = vmatprep.subr.mxu0 0.0
      %821 = vmatpush2.msra.mxu0 0.0
      %822 = vmatprep.subr.mxu0 0.0
      %823 = vmatpush2.msra.mxu0 0.0
      %824 = vmatprep.mubr.f32.mxu0 0.0
      %825 = vmatmul.mubr.f32.gmra.mxu0 %v749
      %v826 = vpop.f32.mrf.mxu0
      %v827 = vadd.f32 %v730, %v826
      %v828 = vpop.f32.mrf.mxu0
      %829 = vmatprep.mubr.f32.mxu0 0.0
      %830 = vmatmul.mubr.f32.gmra.mxu0 %v752
      %v831 = vpop.f32.mrf.mxu0
      %v832 = vadd.f32 %v735, %v831
      %v833 = vpop.f32.mrf.mxu0
      %834 = vmatprep.mubr.f32.mxu0 0.0
      %835 = vmatmul.mubr.f32.gmra.mxu0 %v755
      %v836 = vpop.f32.mrf.mxu0
      %v837 = vadd.f32 %v740, %v836
      %v838 = vpop.f32.mrf.mxu0
      %839 = vmatprep.mubr.f32.mxu0 0.0
      %840 = vmatmul.mubr.f32.gmra.mxu0 %v758
      %v841 = vpop.f32.mrf.mxu0
      %v842 = vadd.f32 %v745, %v841
      %v843 = vpop.f32.mrf.mxu0
      %844 = vdwg.mxu0
      %v845 = vmax.f32 %v827, 0.0
      %v846 = vmax.f32 %v832, 0.0
      %v847 = vmax.f32 %v837, 0.0
      %v848 = vmax.f32 %v842, 0.0
      %v849 = vld [vmem:[%s7] sm:$0xff]
      %v850 = vld [vmem:[%s7 + $0x8] sm:$0xff]
      %v851 = vld [vmem:[%s7 + $0x10] sm:$0xff]
      %v852 = vld [vmem:[%s7 + $0x18] sm:$0xff]
      %v853 = vld [vmem:[%s8] sm:$0xff]
      %v854 = vld [vmem:[%s8 + $0x8] sm:$0xff]
      %v855 = vld [vmem:[%s8 + $0x10] sm:$0xff]
      %v856 = vld [vmem:[%s8 + $0x18] sm:$0xff]
      %858 = vset.pattern.permute.xlu0 0
      %859 = vperm.xlu0 %858, %v853
      %v860 = vpop.permute.xlu0 %859
      %863 = vset.pattern.permute.xlu0 0
      %864 = vperm.xlu0 %863, %v854
      %v865 = vpop.permute.xlu0 %864
      %868 = vset.pattern.permute.xlu0 0
      %869 = vperm.xlu0 %868, %v855
      %v870 = vpop.permute.xlu0 %869
      %873 = vset.pattern.permute.xlu0 0
      %874 = vperm.xlu0 %873, %v856
      %v875 = vpop.permute.xlu0 %874
      %vm877 = vcmask 261120
      %v879 = vsel %vm877, %v849, 0
      %v882 = vsel %vm877, %v850, 0
      %v885 = vsel %vm877, %v851, 0
      %v888 = vsel %vm877, %v852, 0
      %890 = vmatprep.subr.mxu0 0.0
      %891 = vmatpush1.msra.mxu0 0.0
      %892 = vmatprep.subr.mxu0 0.0
      %893 = vmatpush1.msra.mxu0 0.0
      %894 = vmatprep.subr.mxu0 0.0
      %895 = vmatpush1.msra.mxu0 0.0
      %896 = vmatprep.subr.mxu0 0.0
      %897 = vmatpush1.msra.mxu0 0.0
      %898 = vmatprep.subr.mxu0 0.0
      %899 = vmatpush1.msra.mxu0 0.0
      %900 = vmatprep.subr.mxu0 0.0
      %901 = vmatpush1.msra.mxu0 0.0
      %902 = vmatprep.subr.mxu0 0.0
      %903 = vmatpush1.msra.mxu0 0.0
      %904 = vmatprep.subr.mxu0 0.0
      %905 = vmatpush1.msra.mxu0 0.0
      %906 = vmatprep.subr.mxu0 0.0
      %907 = vmatpush1.msra.mxu0 0.0
      %908 = vmatprep.subr.mxu0 0.0
      %909 = vmatpush1.msra.mxu0 0.0
      %910 = vmatprep.subr.mxu0 0.0
      %911 = vmatpush1.msra.mxu0 0.0
      %912 = vmatprep.subr.mxu0 0.0
      %913 = vmatpush1.msra.mxu0 0.0
      %914 = vmatprep.subr.mxu0 0.0
      %915 = vmatpush1.msra.mxu0 %v848
      %916 = vmatprep.subr.mxu0 0.0
      %917 = vmatpush1.msra.mxu0 %v847
      %918 = vmatprep.subr.mxu0 0.0
      %919 = vmatpush1.msra.mxu0 %v846
      %920 = vmatprep.subr.mxu0 0.0
      %921 = vmatpush1.msra.mxu0 %v845
      %922 = vmatprep.subr.mxu0 0.0
      %923 = vmatpush2.msra.mxu0 0.0
      %924 = vmatprep.subr.mxu0 0.0
      %925 = vmatpush2.msra.mxu0 0.0
      %926 = vmatprep.subr.mxu0 0.0
      %927 = vmatpush2.msra.mxu0 0.0
      %928 = vmatprep.subr.mxu0 0.0
      %929 = vmatpush2.msra.mxu0 0.0
      %930 = vmatprep.subr.mxu0 0.0
      %931 = vmatpush2.msra.mxu0 0.0
      %932 = vmatprep.subr.mxu0 0.0
      %933 = vmatpush2.msra.mxu0 0.0
      %934 = vmatprep.subr.mxu0 0.0
      %935 = vmatpush2.msra.mxu0 0.0
      %936 = vmatprep.subr.mxu0 0.0
      %937 = vmatpush2.msra.mxu0 0.0
      %938 = vmatprep.subr.mxu0 0.0
      %939 = vmatpush2.msra.mxu0 0.0
      %940 = vmatprep.subr.mxu0 0.0
      %941 = vmatpush2.msra.mxu0 0.0
      %942 = vmatprep.subr.mxu0 0.0
      %943 = vmatpush2.msra.mxu0 0.0
      %944 = vmatprep.subr.mxu0 0.0
      %945 = vmatpush2.msra.mxu0 0.0
      %946 = vmatprep.subr.mxu0 0.0
      %947 = vmatpush2.msra.mxu0 0.0
      %948 = vmatprep.subr.mxu0 0.0
      %949 = vmatpush2.msra.mxu0 0.0
      %950 = vmatprep.subr.mxu0 0.0
      %951 = vmatpush2.msra.mxu0 0.0
      %952 = vmatprep.subr.mxu0 0.0
      %953 = vmatpush2.msra.mxu0 0.0
      %954 = vmatprep.mubr.f32.mxu0 0.0
      %955 = vmatmul.mubr.f32.gmra.mxu0 %v879
      %v956 = vpop.f32.mrf.mxu0
      %v957 = vadd.f32 %v860, %v956
      %v958 = vpop.f32.mrf.mxu0
      %959 = vmatprep.mubr.f32.mxu0 0.0
      %960 = vmatmul.mubr.f32.gmra.mxu0 %v882
      %v961 = vpop.f32.mrf.mxu0
      %v962 = vadd.f32 %v865, %v961
      %v963 = vpop.f32.mrf.mxu0
      %964 = vmatprep.mubr.f32.mxu0 0.0
      %965 = vmatmul.mubr.f32.gmra.mxu0 %v885
      %v966 = vpop.f32.mrf.mxu0
      %v967 = vadd.f32 %v870, %v966
      %v968 = vpop.f32.mrf.mxu0
      %969 = vmatprep.mubr.f32.mxu0 0.0
      %970 = vmatmul.mubr.f32.gmra.mxu0 %v888
      %v971 = vpop.f32.mrf.mxu0
      %v972 = vadd.f32 %v875, %v971
      %v973 = vpop.f32.mrf.mxu0
      %974 = vdwg.mxu0
      %v975 = vmul.f32 %v957, 0.5
      %v976 = vmul.f32 %v962, 0.5
      %v977 = vmul.f32 %v967, 0.5
      %v978 = vmul.f32 %v972, 0.5
      %v979 = vtanh.pop %v975
      %v980 = vtanh.pop %v976
      %v981 = vtanh.pop %v977
      %v982 = vtanh.pop %v978
      %v983 = vmul.f32 %v979, 0.5
      %v984 = vmul.f32 %v980, 0.5
      %v985 = vmul.f32 %v981, 0.5
      %v986 = vmul.f32 %v982, 0.5
      %v987 = vadd.f32 %v983, 0.5
      %v988 = vadd.f32 %v984, 0.5
      %v989 = vadd.f32 %v985, 0.5
      %v990 = vadd.f32 %v986, 0.5
      %991 = vmatprep.subr.mxu0 0.0
      %992 = vmatpush1.msra.mxu0 0.0
      %993 = vmatprep.subr.mxu0 0.0
      %994 = vmatpush1.msra.mxu0 0.0
      %995 = vmatprep.subr.mxu0 0.0
      %996 = vmatpush1.msra.mxu0 0.0
      %997 = vmatprep.subr.mxu0 0.0
      %998 = vmatpush1.msra.mxu0 0.0
      %999 = vmatprep.subr.mxu0 0.0
      %1000 = vmatpush1.msra.mxu0 0.0
      %1001 = vmatprep.subr.mxu0 0.0
      %1002 = vmatpush1.msra.mxu0 0.0
      %1003 = vmatprep.subr.mxu0 0.0
      %1004 = vmatpush1.msra.mxu0 0.0
      %1005 = vmatprep.subr.mxu0 0.0
      %1006 = vmatpush1.msra.mxu0 0.0
      %1007 = vmatprep.subr.mxu0 0.0
      %1008 = vmatpush1.msra.mxu0 0.0
      %1009 = vmatprep.subr.mxu0 0.0
      %1010 = vmatpush1.msra.mxu0 0.0
      %1011 = vmatprep.subr.mxu0 0.0
      %1012 = vmatpush1.msra.mxu0 0.0
      %1013 = vmatprep.subr.mxu0 0.0
      %1014 = vmatpush1.msra.mxu0 0.0
      %1015 = vmatprep.subr.mxu0 0.0
      %1016 = vmatpush1.msra.mxu0 0.0
      %1017 = vmatprep.subr.mxu0 0.0
      %1018 = vmatpush1.msra.mxu0 0.0
      %1019 = vmatprep.subr.mxu0 0.0
      %1020 = vmatpush1.msra.mxu0 %v988
      %1021 = vmatprep.subr.mxu0 0.0
      %1022 = vmatpush1.msra.mxu0 %v987
      %1023 = vmatprep.subr.mxu0 0.0
      %1024 = vmatpush2.msra.mxu0 0.0
      %1025 = vmatprep.subr.mxu0 0.0
      %1026 = vmatpush2.msra.mxu0 0.0
      %1027 = vmatprep.subr.mxu0 0.0
      %1028 = vmatpush2.msra.mxu0 0.0
      %1029 = vmatprep.subr.mxu0 0.0
      %1030 = vmatpush2.msra.mxu0 0.0
      %1031 = vmatprep.subr.mxu0 0.0
      %1032 = vmatpush2.msra.mxu0 0.0
      %1033 = vmatprep.subr.mxu0 0.0
      %1034 = vmatpush2.msra.mxu0 0.0
      %1035 = vmatprep.subr.mxu0 0.0
      %1036 = vmatpush2.msra.mxu0 0.0
      %1037 = vmatprep.subr.mxu0 0.0
      %1038 = vmatpush2.msra.mxu0 0.0
      %1039 = vmatprep.subr.mxu0 0.0
      %1040 = vmatpush2.msra.mxu0 0.0
      %1041 = vmatprep.subr.mxu0 0.0
      %1042 = vmatpush2.msra.mxu0 0.0
      %1043 = vmatprep.subr.mxu0 0.0
      %1044 = vmatpush2.msra.mxu0 0.0
      %1045 = vmatprep.subr.mxu0 0.0
      %1046 = vmatpush2.msra.mxu0 0.0
      %1047 = vmatprep.subr.mxu0 0.0
      %1048 = vmatpush2.msra.mxu0 0.0
      %1049 = vmatprep.subr.mxu0 0.0
      %1050 = vmatpush2.msra.mxu0 0.0
      %1051 = vmatprep.subr.mxu0 0.0
      %1052 = vmatpush2.msra.mxu0 0.0
      %1053 = vmatprep.subr.mxu0 0.0
      %1054 = vmatpush2.msra.mxu0 0.0
      %1055 = vmatprep.mubr.f32.mxu0 0.0
      %1056 = vmatmul.mubr.f32.gmra.mxu0 %v503
      %v1057 = vpop.f32.mrf.mxu0
      %v1058 = vadd.f32 %v494, %v1057
      %v1059 = vpop.f32.mrf.mxu0
      %1060 = vmatprep.mubr.f32.mxu0 0.0
      %1061 = vmatmul.mubr.f32.gmra.mxu0 %v506
      %v1062 = vpop.f32.mrf.mxu0
      %v1063 = vadd.f32 %v499, %v1062
      %v1064 = vpop.f32.mrf.mxu0
      %1065 = vdwg.mxu0
      %v1066 = vmax.f32 %v1058, 0.0
      %v1067 = vmax.f32 %v1063, 0.0
      %v1069 = vsel %vm644, %v1067, 0
      %1071 = vmatprep.subr.mxu0 0.0
      %1072 = vmatpush1.msra.mxu0 0.0
      %1073 = vmatprep.subr.mxu0 0.0
      %1074 = vmatpush1.msra.mxu0 0.0
      %1075 = vmatprep.subr.mxu0 0.0
      %1076 = vmatpush1.msra.mxu0 0.0
      %1077 = vmatprep.subr.mxu0 0.0
      %1078 = vmatpush1.msra.mxu0 0.0
      %1079 = vmatprep.subr.mxu0 0.0
      %1080 = vmatpush1.msra.mxu0 0.0
      %1081 = vmatprep.subr.mxu0 0.0
      %1082 = vmatpush1.msra.mxu0 0.0
      %1083 = vmatprep.subr.mxu0 0.0
      %1084 = vmatpush1.msra.mxu0 0.0
      %1085 = vmatprep.subr.mxu0 0.0
      %1086 = vmatpush1.msra.mxu0 0.0
      %1087 = vmatprep.subr.mxu0 0.0
      %1088 = vmatpush1.msra.mxu0 0.0
      %1089 = vmatprep.subr.mxu0 0.0
      %1090 = vmatpush1.msra.mxu0 0.0
      %1091 = vmatprep.subr.mxu0 0.0
      %1092 = vmatpush1.msra.mxu0 0.0
      %1093 = vmatprep.subr.mxu0 0.0
      %1094 = vmatpush1.msra.mxu0 0.0
      %1095 = vmatprep.subr.mxu0 0.0
      %1096 = vmatpush1.msra.mxu0 0.0
      %1097 = vmatprep.subr.mxu0 0.0
      %1098 = vmatpush1.msra.mxu0 0.0
      %1099 = vmatprep.subr.mxu0 0.0
      %1100 = vmatpush1.msra.mxu0 %v1069
      %1101 = vmatprep.subr.mxu0 0.0
      %1102 = vmatpush1.msra.mxu0 %v1066
      %1103 = vmatprep.subr.mxu0 0.0
      %1104 = vmatpush2.msra.mxu0 0.0
      %1105 = vmatprep.subr.mxu0 0.0
      %1106 = vmatpush2.msra.mxu0 0.0
      %1107 = vmatprep.subr.mxu0 0.0
      %1108 = vmatpush2.msra.mxu0 0.0
      %1109 = vmatprep.subr.mxu0 0.0
      %1110 = vmatpush2.msra.mxu0 0.0
      %1111 = vmatprep.subr.mxu0 0.0
      %1112 = vmatpush2.msra.mxu0 0.0
      %1113 = vmatprep.subr.mxu0 0.0
      %1114 = vmatpush2.msra.mxu0 0.0
      %1115 = vmatprep.subr.mxu0 0.0
      %1116 = vmatpush2.msra.mxu0 0.0
      %1117 = vmatprep.subr.mxu0 0.0
      %1118 = vmatpush2.msra.mxu0 0.0
      %1119 = vmatprep.subr.mxu0 0.0
      %1120 = vmatpush2.msra.mxu0 0.0
      %1121 = vmatprep.subr.mxu0 0.0
      %1122 = vmatpush2.msra.mxu0 0.0
      %1123 = vmatprep.subr.mxu0 0.0
      %1124 = vmatpush2.msra.mxu0 0.0
      %1125 = vmatprep.subr.mxu0 0.0
      %1126 = vmatpush2.msra.mxu0 0.0
      %1127 = vmatprep.subr.mxu0 0.0
      %1128 = vmatpush2.msra.mxu0 0.0
      %1129 = vmatprep.subr.mxu0 0.0
      %1130 = vmatpush2.msra.mxu0 0.0
      %1131 = vmatprep.subr.mxu0 0.0
      %1132 = vmatpush2.msra.mxu0 0.0
      %1133 = vmatprep.subr.mxu0 0.0
      %1134 = vmatpush2.msra.mxu0 0.0
      %1135 = vmatprep.mubr.f32.mxu0 0.0
      %1136 = vmatmul.mubr.f32.gmra.mxu0 %v642
      %v1137 = vpop.f32.mrf.mxu0
      %v1138 = vadd.f32 %v638, %v1137
      %v1139 = vpop.f32.mrf.mxu0
      %1140 = vdwg.mxu0
      %v1141 = vmax.f32 %v1138, 0.0
      %1142 = vmatprep.subr.mxu0 0.0
      %1143 = vmatpush1.msra.mxu0 0.0
      %1144 = vmatprep.subr.mxu0 0.0
      %1145 = vmatpush1.msra.mxu0 0.0
      %1146 = vmatprep.subr.mxu0 0.0
      %1147 = vmatpush1.msra.mxu0 0.0
      %1148 = vmatprep.subr.mxu0 0.0
      %1149 = vmatpush1.msra.mxu0 0.0
      %1150 = vmatprep.subr.mxu0 0.0
      %1151 = vmatpush1.msra.mxu0 0.0
      %1152 = vmatprep.subr.mxu0 0.0
      %1153 = vmatpush1.msra.mxu0 0.0
      %1154 = vmatprep.subr.mxu0 0.0
      %1155 = vmatpush1.msra.mxu0 0.0
      %1156 = vmatprep.subr.mxu0 0.0
      %1157 = vmatpush1.msra.mxu0 0.0
      %1158 = vmatprep.subr.mxu0 0.0
      %1159 = vmatpush1.msra.mxu0 0.0
      %1160 = vmatprep.subr.mxu0 0.0
      %1161 = vmatpush1.msra.mxu0 0.0
      %1162 = vmatprep.subr.mxu0 0.0
      %1163 = vmatpush1.msra.mxu0 0.0
      %1164 = vmatprep.subr.mxu0 0.0
      %1165 = vmatpush1.msra.mxu0 0.0
      %1166 = vmatprep.subr.mxu0 0.0
      %1167 = vmatpush1.msra.mxu0 0.0
      %1168 = vmatprep.subr.mxu0 0.0
      %1169 = vmatpush1.msra.mxu0 0.0
      %1170 = vmatprep.subr.mxu0 0.0
      %1171 = vmatpush1.msra.mxu0 0.0
      %1172 = vmatprep.subr.mxu0 0.0
      %1173 = vmatpush1.msra.mxu0 %v1141
      %1174 = vmatprep.subr.mxu0 0.0
      %1175 = vmatpush2.msra.mxu0 0.0
      %1176 = vmatprep.subr.mxu0 0.0
      %1177 = vmatpush2.msra.mxu0 0.0
      %1178 = vmatprep.subr.mxu0 0.0
      %1179 = vmatpush2.msra.mxu0 0.0
      %1180 = vmatprep.subr.mxu0 0.0
      %1181 = vmatpush2.msra.mxu0 0.0
      %1182 = vmatprep.subr.mxu0 0.0
      %1183 = vmatpush2.msra.mxu0 0.0
      %1184 = vmatprep.subr.mxu0 0.0
      %1185 = vmatpush2.msra.mxu0 0.0
      %1186 = vmatprep.subr.mxu0 0.0
      %1187 = vmatpush2.msra.mxu0 0.0
      %1188 = vmatprep.subr.mxu0 0.0
      %1189 = vmatpush2.msra.mxu0 0.0
      %1190 = vmatprep.subr.mxu0 0.0
      %1191 = vmatpush2.msra.mxu0 0.0
      %1192 = vmatprep.subr.mxu0 0.0
      %1193 = vmatpush2.msra.mxu0 0.0
      %1194 = vmatprep.subr.mxu0 0.0
      %1195 = vmatpush2.msra.mxu0 0.0
      %1196 = vmatprep.subr.mxu0 0.0
      %1197 = vmatpush2.msra.mxu0 0.0
      %1198 = vmatprep.subr.mxu0 0.0
      %1199 = vmatpush2.msra.mxu0 0.0
      %1200 = vmatprep.subr.mxu0 0.0
      %1201 = vmatpush2.msra.mxu0 0.0
      %1202 = vmatprep.subr.mxu0 0.0
      %1203 = vmatpush2.msra.mxu0 0.0
      %1204 = vmatprep.subr.mxu0 0.0
      %1205 = vmatpush2.msra.mxu0 0.0
      %1206 = vmatprep.mubr.f32.mxu0 0.0
      %1207 = vmatmul.mubr.f32.gmra.mxu0 %v755
      %v1208 = vpop.f32.mrf.mxu0
      %v1209 = vadd.f32 %v740, %v1208
      %v1210 = vpop.f32.mrf.mxu0
      %1211 = vmatprep.mubr.f32.mxu0 0.0
      %1212 = vmatmul.mubr.f32.gmra.mxu0 %v758
      %v1213 = vpop.f32.mrf.mxu0
      %v1214 = vadd.f32 %v745, %v1213
      %v1215 = vpop.f32.mrf.mxu0
      %1216 = vdwg.mxu0
      %v1217 = vmax.f32 %v1209, 0.0
      %v1218 = vmax.f32 %v1214, 0.0
      %v1219 = vld [vmem:[%s9] sm:$0xff]
      %v1220 = vld [vmem:[%s9 + $0x8] sm:$0xff]
      %v1221 = vld [vmem:[%s10] sm:$0xff]
      %v1222 = vld [vmem:[%s10 + $0x8] sm:$0xff]
      %1224 = vset.pattern.permute.xlu0 0
      %1225 = vperm.xlu0 %1224, %v1221
      %v1226 = vpop.permute.xlu0 %1225
      %1229 = vset.pattern.permute.xlu0 0
      %1230 = vperm.xlu0 %1229, %v1222
      %v1231 = vpop.permute.xlu0 %1230
      %v1234 = vsel %vm501, %v1219, 0
      %v1237 = vsel %vm501, %v1220, 0
      %1239 = vmatprep.subr.mxu0 0.0
      %1240 = vmatpush1.msra.mxu0 0.0
      %1241 = vmatprep.subr.mxu0 0.0
      %1242 = vmatpush1.msra.mxu0 0.0
      %1243 = vmatprep.subr.mxu0 0.0
      %1244 = vmatpush1.msra.mxu0 0.0
      %1245 = vmatprep.subr.mxu0 0.0
      %1246 = vmatpush1.msra.mxu0 0.0
      %1247 = vmatprep.subr.mxu0 0.0
      %1248 = vmatpush1.msra.mxu0 0.0
      %1249 = vmatprep.subr.mxu0 0.0
      %1250 = vmatpush1.msra.mxu0 0.0
      %1251 = vmatprep.subr.mxu0 0.0
      %1252 = vmatpush1.msra.mxu0 0.0
      %1253 = vmatprep.subr.mxu0 0.0
      %1254 = vmatpush1.msra.mxu0 0.0
      %1255 = vmatprep.subr.mxu0 0.0
      %1256 = vmatpush1.msra.mxu0 0.0
      %1257 = vmatprep.subr.mxu0 0.0
      %1258 = vmatpush1.msra.mxu0 0.0
      %1259 = vmatprep.subr.mxu0 0.0
      %1260 = vmatpush1.msra.mxu0 0.0
      %1261 = vmatprep.subr.mxu0 0.0
      %1262 = vmatpush1.msra.mxu0 0.0
      %1263 = vmatprep.subr.mxu0 0.0
      %1264 = vmatpush1.msra.mxu0 0.0
      %1265 = vmatprep.subr.mxu0 0.0
      %1266 = vmatpush1.msra.mxu0 0.0
      %1267 = vmatprep.subr.mxu0 0.0
      %1268 = vmatpush1.msra.mxu0 %v1218
      %1269 = vmatprep.subr.mxu0 0.0
      %1270 = vmatpush1.msra.mxu0 %v1217
      %1271 = vmatprep.subr.mxu0 0.0
      %1272 = vmatpush2.msra.mxu0 0.0
      %1273 = vmatprep.subr.mxu0 0.0
      %1274 = vmatpush2.msra.mxu0 0.0
      %1275 = vmatprep.subr.mxu0 0.0
      %1276 = vmatpush2.msra.mxu0 0.0
      %1277 = vmatprep.subr.mxu0 0.0
      %1278 = vmatpush2.msra.mxu0 0.0
      %1279 = vmatprep.subr.mxu0 0.0
      %1280 = vmatpush2.msra.mxu0 0.0
      %1281 = vmatprep.subr.mxu0 0.0
      %1282 = vmatpush2.msra.mxu0 0.0
      %1283 = vmatprep.subr.mxu0 0.0
      %1284 = vmatpush2.msra.mxu0 0.0
      %1285 = vmatprep.subr.mxu0 0.0
      %1286 = vmatpush2.msra.mxu0 0.0
      %1287 = vmatprep.subr.mxu0 0.0
      %1288 = vmatpush2.msra.mxu0 0.0
      %1289 = vmatprep.subr.mxu0 0.0
      %1290 = vmatpush2.msra.mxu0 0.0
      %1291 = vmatprep.subr.mxu0 0.0
      %1292 = vmatpush2.msra.mxu0 0.0
      %1293 = vmatprep.subr.mxu0 0.0
      %1294 = vmatpush2.msra.mxu0 0.0
      %1295 = vmatprep.subr.mxu0 0.0
      %1296 = vmatpush2.msra.mxu0 0.0
      %1297 = vmatprep.subr.mxu0 0.0
      %1298 = vmatpush2.msra.mxu0 0.0
      %1299 = vmatprep.subr.mxu0 0.0
      %1300 = vmatpush2.msra.mxu0 0.0
      %1301 = vmatprep.subr.mxu0 0.0
      %1302 = vmatpush2.msra.mxu0 0.0
      %1303 = vmatprep.mubr.f32.mxu0 0.0
      %1304 = vmatmul.mubr.f32.gmra.mxu0 %v1234
      %v1305 = vpop.f32.mrf.mxu0
      %v1306 = vadd.f32 %v1226, %v1305
      %v1307 = vpop.f32.mrf.mxu0
      %1308 = vmatprep.mubr.f32.mxu0 0.0
      %1309 = vmatmul.mubr.f32.gmra.mxu0 %v1237
      %v1310 = vpop.f32.mrf.mxu0
      %v1311 = vadd.f32 %v1231, %v1310
      %v1312 = vpop.f32.mrf.mxu0
      %1313 = vdwg.mxu0
      %v1314 = vmul.f32 %v1306, 0.5
      %v1315 = vmul.f32 %v1311, 0.5
      %v1316 = vtanh.pop %v1314
      %v1317 = vtanh.pop %v1315
      %v1318 = vmul.f32 %v1316, 0.5
      %v1319 = vmul.f32 %v1317, 0.5
      %v1320 = vadd.f32 %v1318, 0.5
      %v1321 = vadd.f32 %v1319, 0.5
      %1322 = vxpose.xlu0.b32.start [1/16] %v987, 128
      %1323 = vxpose.xlu0.b32.cont [2/16] %v988, 128
      %1324 = vxpose.xlu0.b32.cont [3/16] 0.0, 128
      %1325 = vxpose.xlu0.b32.cont [4/16] 0.0, 128
      %1326 = vxpose.xlu0.b32.cont [5/16] 0.0, 128
      %1327 = vxpose.xlu0.b32.cont [6/16] 0.0, 128
      %1328 = vxpose.xlu0.b32.cont [7/16] 0.0, 128
      %1329 = vxpose.xlu0.b32.cont [8/16] 0.0, 128
      %1330 = vxpose.xlu0.b32.cont [9/16] 0.0, 128
      %1331 = vxpose.xlu0.b32.cont [10/16] 0.0, 128
      %1332 = vxpose.xlu0.b32.cont [11/16] 0.0, 128
      %1333 = vxpose.xlu0.b32.cont [12/16] 0.0, 128
      %1334 = vxpose.xlu0.b32.cont [13/16] 0.0, 128
      %1335 = vxpose.xlu0.b32.cont [14/16] 0.0, 128
      %1336 = vxpose.xlu0.b32.cont [15/16] 0.0, 128
      %1337 = vxpose.xlu0.b32.end [16/16] 0.0, 128
      %v1338 = vpop.trf.xlu0
      %v1339 = vpop.trf.xlu0
      %v1340 = vpop.trf.xlu0
      %v1341 = vpop.trf.xlu0
      %v1342 = vpop.trf.xlu0
      %v1343 = vpop.trf.xlu0
      %v1344 = vpop.trf.xlu0
      %v1345 = vpop.trf.xlu0
      %v1346 = vpop.trf.xlu0
      %v1347 = vpop.trf.xlu0
      %v1348 = vpop.trf.xlu0
      %v1349 = vpop.trf.xlu0
      %v1350 = vpop.trf.xlu0
      %v1351 = vpop.trf.xlu0
      %v1352 = vpop.trf.xlu0
      %v1353 = vpop.trf.xlu0
      %v1354 = vpack.c.bf16 %v1339, %v1338
      %v1355 = vpack.c.bf16 %v1341, %v1340
      %v1356 = vpack.c.bf16 %v1343, %v1342
      %v1357 = vpack.c.bf16 %v1345, %v1344
      %v1358 = vpack.c.bf16 %v1347, %v1346
      %v1359 = vpack.c.bf16 %v1349, %v1348
      %v1360 = vpack.c.bf16 %v1351, %v1350
      %v1361 = vpack.c.bf16 %v1353, %v1352
      %v1370 = vunpack.c.l.b16 %v1354
      %v1371 = vunpack.c.h.b16 %v1354
      %v1372 = vunpack.c.l.b16 %v1355
      %v1373 = vunpack.c.h.b16 %v1355
      %v1374 = vunpack.c.l.b16 %v1356
      %v1375 = vunpack.c.h.b16 %v1356
      %v1376 = vunpack.c.l.b16 %v1357
      %v1377 = vunpack.c.h.b16 %v1357
      %v1378 = vunpack.c.l.b16 %v1358
      %v1379 = vunpack.c.h.b16 %v1358
      %v1380 = vunpack.c.l.b16 %v1359
      %v1381 = vunpack.c.h.b16 %v1359
      %v1382 = vunpack.c.l.b16 %v1360
      %v1383 = vunpack.c.h.b16 %v1360
      %v1384 = vunpack.c.l.b16 %v1361
      %v1385 = vunpack.c.h.b16 %v1361
      %v1386 = vpack.c.b16 %v1370, %v1370
      %v1387 = vpack.c.b16 %v1371, %v1371
      %v1388 = vpack.c.b16 %v1372, %v1372
      %v1389 = vpack.c.b16 %v1373, %v1373
      %v1390 = vpack.c.b16 %v1374, %v1374
      %v1391 = vpack.c.b16 %v1375, %v1375
      %v1392 = vpack.c.b16 %v1376, %v1376
      %v1393 = vpack.c.b16 %v1377, %v1377
      %v1394 = vpack.c.b16 %v1378, %v1378
      %v1395 = vpack.c.b16 %v1379, %v1379
      %v1396 = vpack.c.b16 %v1380, %v1380
      %v1397 = vpack.c.b16 %v1381, %v1381
      %v1398 = vpack.c.b16 %v1382, %v1382
      %v1399 = vpack.c.b16 %v1383, %v1383
      %v1400 = vpack.c.b16 %v1384, %v1384
      %v1401 = vpack.c.b16 %v1385, %v1385
      %vm1418 = vcmask 125952
      %1419 = vst.msk [vmem:[%s457] sm:$0xf] %vm1418, %v1386
      %1420 = vst.msk [vmem:[%s457 + $0x4] sm:$0xf] %vm1418, %v1387
      %1421 = vst.msk [vmem:[%s457 + $0x8] sm:$0xf] %vm1418, %v1388
      %1422 = vst.msk [vmem:[%s457 + $0xc] sm:$0xf] %vm1418, %v1389
      %1423 = vst.msk [vmem:[%s457 + $0x10] sm:$0xf] %vm1418, %v1390
      %1424 = vst.msk [vmem:[%s457 + $0x14] sm:$0xf] %vm1418, %v1391
      %1425 = vst.msk [vmem:[%s457 + $0x18] sm:$0xf] %vm1418, %v1392
      %1426 = vst.msk [vmem:[%s457 + $0x1c] sm:$0xf] %vm1418, %v1393
      %1427 = vst.msk [vmem:[%s457 + $0x20] sm:$0xf] %vm1418, %v1394
      %1428 = vst.msk [vmem:[%s457 + $0x24] sm:$0xf] %vm1418, %v1395
      %1429 = vst.msk [vmem:[%s457 + $0x28] sm:$0xf] %vm1418, %v1396
      %1430 = vst.msk [vmem:[%s457 + $0x2c] sm:$0xf] %vm1418, %v1397
      %1431 = vst.msk [vmem:[%s457 + $0x30] sm:$0xf] %vm1418, %v1398
      %1432 = vst.msk [vmem:[%s457 + $0x34] sm:$0xf] %vm1418, %v1399
      %1433 = vst.msk [vmem:[%s457 + $0x38] sm:$0xf] %vm1418, %v1400
      %1434 = vst.msk [vmem:[%s457 + $0x3c] sm:$0xf] %vm1418, %v1401
      %1435 = vxpose.xlu0.b32.start [1/16] %v989, 128
      %1436 = vxpose.xlu0.b32.cont [2/16] %v990, 128
      %1437 = vxpose.xlu0.b32.cont [3/16] 0.0, 128
      %1438 = vxpose.xlu0.b32.cont [4/16] 0.0, 128
      %1439 = vxpose.xlu0.b32.cont [5/16] 0.0, 128
      %1440 = vxpose.xlu0.b32.cont [6/16] 0.0, 128
      %1441 = vxpose.xlu0.b32.cont [7/16] 0.0, 128
      %1442 = vxpose.xlu0.b32.cont [8/16] 0.0, 128
      %1443 = vxpose.xlu0.b32.cont [9/16] 0.0, 128
      %1444 = vxpose.xlu0.b32.cont [10/16] 0.0, 128
      %1445 = vxpose.xlu0.b32.cont [11/16] 0.0, 128
      %1446 = vxpose.xlu0.b32.cont [12/16] 0.0, 128
      %1447 = vxpose.xlu0.b32.cont [13/16] 0.0, 128
      %1448 = vxpose.xlu0.b32.cont [14/16] 0.0, 128
      %1449 = vxpose.xlu0.b32.cont [15/16] 0.0, 128
      %1450 = vxpose.xlu0.b32.end [16/16] 0.0, 128
      %v1451 = vpop.trf.xlu0
      %v1452 = vpop.trf.xlu0
      %v1453 = vpop.trf.xlu0
      %v1454 = vpop.trf.xlu0
      %v1455 = vpop.trf.xlu0
      %v1456 = vpop.trf.xlu0
      %v1457 = vpop.trf.xlu0
      %v1458 = vpop.trf.xlu0
      %v1459 = vpop.trf.xlu0
      %v1460 = vpop.trf.xlu0
      %v1461 = vpop.trf.xlu0
      %v1462 = vpop.trf.xlu0
      %v1463 = vpop.trf.xlu0
      %v1464 = vpop.trf.xlu0
      %v1465 = vpop.trf.xlu0
      %v1466 = vpop.trf.xlu0
      %v1467 = vpack.c.bf16 %v1452, %v1451
      %v1468 = vpack.c.bf16 %v1454, %v1453
      %v1469 = vpack.c.bf16 %v1456, %v1455
      %v1470 = vpack.c.bf16 %v1458, %v1457
      %v1471 = vpack.c.bf16 %v1460, %v1459
      %v1472 = vpack.c.bf16 %v1462, %v1461
      %v1473 = vpack.c.bf16 %v1464, %v1463
      %v1474 = vpack.c.bf16 %v1466, %v1465
      %v1483 = vunpack.c.l.b16 %v1467
      %v1484 = vunpack.c.h.b16 %v1467
      %v1485 = vunpack.c.l.b16 %v1468
      %v1486 = vunpack.c.h.b16 %v1468
      %v1487 = vunpack.c.l.b16 %v1469
      %v1488 = vunpack.c.h.b16 %v1469
      %v1489 = vunpack.c.l.b16 %v1470
      %v1490 = vunpack.c.h.b16 %v1470
      %v1491 = vunpack.c.l.b16 %v1471
      %v1492 = vunpack.c.h.b16 %v1471
      %v1493 = vunpack.c.l.b16 %v1472
      %v1494 = vunpack.c.h.b16 %v1472
      %v1495 = vunpack.c.l.b16 %v1473
      %v1496 = vunpack.c.h.b16 %v1473
      %v1497 = vunpack.c.l.b16 %v1474
      %v1498 = vunpack.c.h.b16 %v1474
      %v1499 = vpack.c.b16 %v1483, %v1483
      %v1500 = vpack.c.b16 %v1484, %v1484
      %v1501 = vpack.c.b16 %v1485, %v1485
      %v1502 = vpack.c.b16 %v1486, %v1486
      %v1503 = vpack.c.b16 %v1487, %v1487
      %v1504 = vpack.c.b16 %v1488, %v1488
      %v1505 = vpack.c.b16 %v1489, %v1489
      %v1506 = vpack.c.b16 %v1490, %v1490
      %v1507 = vpack.c.b16 %v1491, %v1491
      %v1508 = vpack.c.b16 %v1492, %v1492
      %v1509 = vpack.c.b16 %v1493, %v1493
      %v1510 = vpack.c.b16 %v1494, %v1494
      %v1511 = vpack.c.b16 %v1495, %v1495
      %v1512 = vpack.c.b16 %v1496, %v1496
      %v1513 = vpack.c.b16 %v1497, %v1497
      %v1514 = vpack.c.b16 %v1498, %v1498
      %1531 = vst.msk [vmem:[%s463] sm:$0xf] %vm1418, %v1499
      %1532 = vst.msk [vmem:[%s463 + $0x4] sm:$0xf] %vm1418, %v1500
      %1533 = vst.msk [vmem:[%s463 + $0x8] sm:$0xf] %vm1418, %v1501
      %1534 = vst.msk [vmem:[%s463 + $0xc] sm:$0xf] %vm1418, %v1502
      %1535 = vst.msk [vmem:[%s463 + $0x10] sm:$0xf] %vm1418, %v1503
      %1536 = vst.msk [vmem:[%s463 + $0x14] sm:$0xf] %vm1418, %v1504
      %1537 = vst.msk [vmem:[%s463 + $0x18] sm:$0xf] %vm1418, %v1505
      %1538 = vst.msk [vmem:[%s463 + $0x1c] sm:$0xf] %vm1418, %v1506
      %1539 = vst.msk [vmem:[%s463 + $0x20] sm:$0xf] %vm1418, %v1507
      %1540 = vst.msk [vmem:[%s463 + $0x24] sm:$0xf] %vm1418, %v1508
      %1541 = vst.msk [vmem:[%s463 + $0x28] sm:$0xf] %vm1418, %v1509
      %1542 = vst.msk [vmem:[%s463 + $0x2c] sm:$0xf] %vm1418, %v1510
      %1543 = vst.msk [vmem:[%s463 + $0x30] sm:$0xf] %vm1418, %v1511
      %1544 = vst.msk [vmem:[%s463 + $0x34] sm:$0xf] %vm1418, %v1512
      %1545 = vst.msk [vmem:[%s463 + $0x38] sm:$0xf] %vm1418, %v1513
      %1546 = vst.msk [vmem:[%s463 + $0x3c] sm:$0xf] %vm1418, %v1514
      %1547 = vxpose.xlu0.b32.start [1/16] %v1320, 128
      %1548 = vxpose.xlu0.b32.cont [2/16] %v1321, 128
      %1549 = vxpose.xlu0.b32.cont [3/16] 0.0, 128
      %1550 = vxpose.xlu0.b32.cont [4/16] 0.0, 128
      %1551 = vxpose.xlu0.b32.cont [5/16] 0.0, 128
      %1552 = vxpose.xlu0.b32.cont [6/16] 0.0, 128
      %1553 = vxpose.xlu0.b32.cont [7/16] 0.0, 128
      %1554 = vxpose.xlu0.b32.cont [8/16] 0.0, 128
      %1555 = vxpose.xlu0.b32.cont [9/16] 0.0, 128
      %1556 = vxpose.xlu0.b32.cont [10/16] 0.0, 128
      %1557 = vxpose.xlu0.b32.cont [11/16] 0.0, 128
      %1558 = vxpose.xlu0.b32.cont [12/16] 0.0, 128
      %1559 = vxpose.xlu0.b32.cont [13/16] 0.0, 128
      %1560 = vxpose.xlu0.b32.cont [14/16] 0.0, 128
      %1561 = vxpose.xlu0.b32.cont [15/16] 0.0, 128
      %1562 = vxpose.xlu0.b32.end [16/16] 0.0, 128
      %v1563 = vpop.trf.xlu0
      %v1564 = vpop.trf.xlu0
      %v1565 = vpop.trf.xlu0
      %v1566 = vpop.trf.xlu0
      %v1567 = vpop.trf.xlu0
      %v1568 = vpop.trf.xlu0
      %v1569 = vpop.trf.xlu0
      %v1570 = vpop.trf.xlu0
      %v1571 = vpop.trf.xlu0
      %v1572 = vpop.trf.xlu0
      %v1573 = vpop.trf.xlu0
      %v1574 = vpop.trf.xlu0
      %v1575 = vpop.trf.xlu0
      %v1576 = vpop.trf.xlu0
      %v1577 = vpop.trf.xlu0
      %v1578 = vpop.trf.xlu0
      %v1579 = vpack.c.bf16 %v1564, %v1563
      %v1580 = vpack.c.bf16 %v1566, %v1565
      %v1581 = vpack.c.bf16 %v1568, %v1567
      %v1582 = vpack.c.bf16 %v1570, %v1569
      %v1583 = vpack.c.bf16 %v1572, %v1571
      %v1584 = vpack.c.bf16 %v1574, %v1573
      %v1585 = vpack.c.bf16 %v1576, %v1575
      %v1586 = vpack.c.bf16 %v1578, %v1577
      %v1595 = vunpack.c.l.b16 %v1579
      %v1596 = vunpack.c.h.b16 %v1579
      %v1597 = vunpack.c.l.b16 %v1580
      %v1598 = vunpack.c.h.b16 %v1580
      %v1599 = vunpack.c.l.b16 %v1581
      %v1600 = vunpack.c.h.b16 %v1581
      %v1601 = vunpack.c.l.b16 %v1582
      %v1602 = vunpack.c.h.b16 %v1582
      %v1603 = vunpack.c.l.b16 %v1583
      %v1604 = vunpack.c.h.b16 %v1583
      %v1605 = vunpack.c.l.b16 %v1584
      %v1606 = vunpack.c.h.b16 %v1584
      %v1607 = vunpack.c.l.b16 %v1585
      %v1608 = vunpack.c.h.b16 %v1585
      %v1609 = vunpack.c.l.b16 %v1586
      %v1610 = vunpack.c.h.b16 %v1586
      %v1611 = vpack.c.b16 %v1595, %v1595
      %v1612 = vpack.c.b16 %v1596, %v1596
      %v1613 = vpack.c.b16 %v1597, %v1597
      %v1614 = vpack.c.b16 %v1598, %v1598
      %v1615 = vpack.c.b16 %v1599, %v1599
      %v1616 = vpack.c.b16 %v1600, %v1600
      %v1617 = vpack.c.b16 %v1601, %v1601
      %v1618 = vpack.c.b16 %v1602, %v1602
      %v1619 = vpack.c.b16 %v1603, %v1603
      %v1620 = vpack.c.b16 %v1604, %v1604
      %v1621 = vpack.c.b16 %v1605, %v1605
      %v1622 = vpack.c.b16 %v1606, %v1606
      %v1623 = vpack.c.b16 %v1607, %v1607
      %v1624 = vpack.c.b16 %v1608, %v1608
      %v1625 = vpack.c.b16 %v1609, %v1609
      %v1626 = vpack.c.b16 %v1610, %v1610
      %1643 = vst.msk [vmem:[%s469] sm:$0xf] %vm1418, %v1611
      %1644 = vst.msk [vmem:[%s469 + $0x4] sm:$0xf] %vm1418, %v1612
      %1645 = vst.msk [vmem:[%s469 + $0x8] sm:$0xf] %vm1418, %v1613
      %1646 = vst.msk [vmem:[%s469 + $0xc] sm:$0xf] %vm1418, %v1614
      %1647 = vst.msk [vmem:[%s469 + $0x10] sm:$0xf] %vm1418, %v1615
      %1648 = vst.msk [vmem:[%s469 + $0x14] sm:$0xf] %vm1418, %v1616
      %1649 = vst.msk [vmem:[%s469 + $0x18] sm:$0xf] %vm1418, %v1617
      %1650 = vst.msk [vmem:[%s469 + $0x1c] sm:$0xf] %vm1418, %v1618
      %1651 = vst.msk [vmem:[%s469 + $0x20] sm:$0xf] %vm1418, %v1619
      %1652 = vst.msk [vmem:[%s469 + $0x24] sm:$0xf] %vm1418, %v1620
      %1653 = vst.msk [vmem:[%s469 + $0x28] sm:$0xf] %vm1418, %v1621
      %1654 = vst.msk [vmem:[%s469 + $0x2c] sm:$0xf] %vm1418, %v1622
      %1655 = vst.msk [vmem:[%s469 + $0x30] sm:$0xf] %vm1418, %v1623
      %1656 = vst.msk [vmem:[%s469 + $0x34] sm:$0xf] %vm1418, %v1624
      %1657 = vst.msk [vmem:[%s469 + $0x38] sm:$0xf] %vm1418, %v1625
      %1658 = vst.msk [vmem:[%s469 + $0x3c] sm:$0xf] %vm1418, %v1626
      %s1659 = smul.u32 16, %s25
      %p1660 = scmp.lt.s32.totalorder %s1659, 47
      %s1661 = scalar_select %p1660, %s1659, 47
      %s1662 = smul.addr %s1661, 4
      %s1663 = scalar_lea.vmem %s11, %s1662
      %s1664 = smul.u32 16, %s25
      %p1665 = scmp.lt.s32.totalorder %s1664, 47
      %s1666 = scalar_select %p1665, %s1664, 47
      %s1667 = smul.addr %s1666, 4
      %s1668 = scalar_lea.vmem %s12, %s1667
      %s1669 = smul.u32 16, %s25
      %p1670 = scmp.lt.s32.totalorder %s1669, 47
      %s1671 = scalar_select %p1670, %s1669, 47
      %s1672 = smul.addr %s1671, 4
      %s1673 = scalar_lea.vmem %s13, %s1672
      // Predicated region
      $region65: #{tpu_custom_call.1} parent=63 // pred_check
        %p1674 = pneg %p279
      $region66: #{tpu_custom_call.1} parent=63 // pred_check_branch
        %1676 = sbr.rel (%p1674) target = $region68
      $region67: #{tpu_custom_call.1} parent=63 // pred_region
        %s1677 = smul.u32 16, %s25
      $region68: #{tpu_custom_call.1} parent=63 // pred_fallthru
        _
      // Predicated region
      $region69: #{tpu_custom_call.1} parent=63 // pred_check
        %p1678 = pneg %p305
      $region70: #{tpu_custom_call.1} parent=63 // pred_check_branch
        %1680 = sbr.rel (%p1678) target = $region72
      $region71: #{tpu_custom_call.1} parent=63 // pred_region
        %s1681 = smul.u32 16, %s25
      $region72: #{tpu_custom_call.1} parent=63 // pred_fallthru
        _
      // Predicated region
      $region73: #{tpu_custom_call.1} parent=63 // pred_check
        %p1682 = pneg %p331
      $region74: #{tpu_custom_call.1} parent=63 // pred_check_branch
        %1684 = sbr.rel (%p1682) target = $region76
      $region75: #{tpu_custom_call.1} parent=63 // pred_region
        %s1685 = smul.u32 16, %s25
      $region76: #{tpu_custom_call.1} parent=63 // pred_fallthru
        _
    $region64: #{tpu_custom_call.1} parent=5 // pred_fallthru
      _
    %p1686 = scmp.le.s32.totalorder 2, %s20
    // Predicated region
    $region77: #{tpu_custom_call.1} parent=5 // pred_check
      %p1687 = pneg %p1686
    $region78: #{tpu_custom_call.1} parent=5 // pred_check_branch
      %1689 = sbr.rel (%p1687) target = $region80
    $region79: #{tpu_custom_call.1} parent=5 // pred_region
      %s1690 = ssub.s32 %s20, 2
      // Predicated region
      $region81: #{tpu_custom_call.1} parent=79 // pred_check
        %p1691 = pneg %p285
      $region82: #{tpu_custom_call.1} parent=79 // pred_check_branch
        %1693 = sbr.rel (%p1691) target = $region84
      $region83: #{tpu_custom_call.1} parent=79 // pred_region
        %s1694 = smul.u32 16, %s26
        %p1695 = scmp.lt.s32.totalorder %s1694, 47
        %s1696 = scalar_select %p1695, %s1694, 47
        %s1697 = smul.addr %s1696, 4
        %s1698 = scalar_lea.vmem %s11, %s1697
      $region84: #{tpu_custom_call.1} parent=79 // pred_fallthru
        _
      // Predicated region
      $region85: #{tpu_custom_call.1} parent=79 // pred_check
        %p1699 = pneg %p311
      $region86: #{tpu_custom_call.1} parent=79 // pred_check_branch
        %1701 = sbr.rel (%p1699) target = $region88
      $region87: #{tpu_custom_call.1} parent=79 // pred_region
        %s1702 = smul.u32 16, %s26
        %p1703 = scmp.lt.s32.totalorder %s1702, 47
        %s1704 = scalar_select %p1703, %s1702, 47
        %s1705 = smul.addr %s1704, 4
        %s1706 = scalar_lea.vmem %s12, %s1705
      $region88: #{tpu_custom_call.1} parent=79 // pred_fallthru
        _
      // Predicated region
      $region89: #{tpu_custom_call.1} parent=79 // pred_check
        %p1707 = pneg %p337
      $region90: #{tpu_custom_call.1} parent=79 // pred_check_branch
        %1709 = sbr.rel (%p1707) target = $region92
      $region91: #{tpu_custom_call.1} parent=79 // pred_region
        %s1710 = smul.u32 16, %s26
        %p1711 = scmp.lt.s32.totalorder %s1710, 47
        %s1712 = scalar_select %p1711, %s1710, 47
        %s1713 = smul.addr %s1712, 4
        %s1714 = scalar_lea.vmem %s13, %s1713
      $region92: #{tpu_custom_call.1} parent=79 // pred_fallthru
        _
    $region80: #{tpu_custom_call.1} parent=5 // pred_fallthru
      _
  $region6: #{tpu_custom_call.1} parent=0 // loop_footer
    %s24 = sadd.s32 1, %s20
  $region7: #{tpu_custom_call.1} parent=0 // loop_footer_branch
    %19 = sbr.rel target = $region3
  $region8: #{tpu_custom_call.1} parent=0 // loop_exit
    _

</llo_original>
